<compile_context>
chip_gen: v6e
topology: v6e:2x2x1
jax: 0.10.0
libtpu: 0.0.40
codegen_flags: <defaults>
</compile_context>

<pallas_src>
import math
import functools

import jax
import jax.numpy as jnp
from jax.experimental import pallas as pl
from jax.experimental.pallas import tpu as pltpu

# ---------------- model config (matches the PyTorch module usage) ------------
HIDDEN_DIM = 32
NUM_HEADS = 4
HEAD_DIM = HIDDEN_DIM // NUM_HEADS
BATCH = 2
SEQ = 8
LANE = 128


# ---------------- Pallas kernel ----------------------------------------------
def mha_kernel(x_ref, wq_ref, wk_ref, wv_ref, bq_ref, bk_ref, bv_ref,
               wout_ref, bout_ref, o_ref, *, batch, seq, num_heads, head_dim):
    """Full MHA forward for the whole (B*S, H) batch in one invocation.

    x_ref    : (B*S, H)            flattened activations
    wq/k/v   : (nh, H, hd)         head-major projection weights (y = x @ W)
    bq/k/v   : (nh, 1, hd)         head-major projection biases
    wout_ref : (nh, hd, H_pad)     head-major out-projection (lane-padded)
    bout_ref : (1, H_pad)          out-projection bias (lane-padded)
    o_ref    : (B*S, H_pad)        lane-dense output
    """
    x = x_ref[...]                                  # (B*S, H), f32
    scale = 1.0 / math.sqrt(head_dim)

    acc = jnp.zeros(o_ref.shape, jnp.float32)       # (B*S, H_pad) accumulator

    # Statically unrolled loop over heads.  Every contraction is either a
    # plain 2-D matmul or a single-batch-dim einsum (well-supported Mosaic
    # patterns); there is no lane slicing and no concatenate.
    for h in range(num_heads):
        qh = jnp.dot(x, wq_ref[h], preferred_element_type=jnp.float32) + bq_ref[h]
        kh = jnp.dot(x, wk_ref[h], preferred_element_type=jnp.float32) + bk_ref[h]
        vh = jnp.dot(x, wv_ref[h], preferred_element_type=jnp.float32) + bv_ref[h]
        qh = qh * scale                             # scale q, not the scores

        q3 = qh.reshape(batch, seq, head_dim)       # (B, S, hd)
        k3 = kh.reshape(batch, seq, head_dim)
        v3 = vh.reshape(batch, seq, head_dim)

        # Per-batch attention for this head.
        s = jnp.einsum('bqd,bkd->bqk', q3, k3,
                       preferred_element_type=jnp.float32)      # (B, S, S)
        s = s - jnp.max(s, axis=-1, keepdims=True)
        p = jnp.exp(s)
        p = p * pl.reciprocal(jnp.sum(p, axis=-1, keepdims=True), approx=True)

        ctx = jnp.einsum('bqk,bkd->bqd', p, v3,
                         preferred_element_type=jnp.float32)     # (B, S, hd)

        # Per-head slice of the output projection; accumulation replaces the
        # lane-wise concatenate of head outputs.
        acc = acc + jnp.dot(ctx.reshape(batch * seq, head_dim), wout_ref[h],
                            preferred_element_type=jnp.float32)

    o_ref[...] = (acc + bout_ref[...]).astype(o_ref.dtype)


# ---------------- wrapper -----------------------------------------------------
def mha_forward(x, wqkv, bqkv, wout, bout, *, num_heads=NUM_HEADS):
    """x: (B, S, H).  Weights in torch layout:
       wqkv: (3H, H), bqkv: (3H,), wout: (H, H), bout: (H,)."""
    B, S, H = x.shape
    hd = H // num_heads
    h_pad = ((H + LANE - 1) // LANE) * LANE          # lane-dense output width

    # ---- wrapper-side re-layout (free XLA work, once per call) ----
    def head_major(w_rows):                          # torch (H_out, H_in) -> (nh, H_in, hd)
        return w_rows.T.reshape(H, num_heads, hd).transpose(1, 0, 2)

    wq_h = head_major(wqkv[0 * H:1 * H])
    wk_h = head_major(wqkv[1 * H:2 * H])
    wv_h = head_major(wqkv[2 * H:3 * H])
    bq_h = bqkv[0 * H:1 * H].reshape(num_heads, 1, hd)
    bk_h = bqkv[1 * H:2 * H].reshape(num_heads, 1, hd)
    bv_h = bqkv[2 * H:3 * H].reshape(num_heads, 1, hd)

    wout_t = jnp.zeros((H, h_pad), x.dtype).at[:, :H].set(wout.T)
    wout_h = wout_t.reshape(num_heads, hd, h_pad)    # (nh, hd, H_pad)
    bout_p = jnp.zeros((1, h_pad), x.dtype).at[0, :H].set(bout)

    x2d = x.reshape(B * S, H)

    kernel = functools.partial(mha_kernel, batch=B, seq=S,
                               num_heads=num_heads, head_dim=hd)
    vmem = pltpu.MemorySpace.VMEM
    out_pad = pl.pallas_call(
        kernel,
        out_shape=jax.ShapeDtypeStruct((B * S, h_pad), x.dtype),
        in_specs=[pl.BlockSpec(memory_space=vmem)] * 9,
        out_specs=pl.BlockSpec(memory_space=vmem),
    )(x2d, wq_h, wk_h, wv_h, bq_h, bk_h, bv_h, wout_h, bout_p)

    return out_pad[:, :H].reshape(B, S, H)


# ---------------- pure-JAX reference (sanity check) ---------------------------
def mha_reference(x, wqkv, bqkv, wout, bout, num_heads):
    B, S, H = x.shape
    hd = H // num_heads
    qkv = x @ wqkv.T + bqkv
    q, k, v = jnp.split(qkv, 3, axis=-1)

    def heads(t):  # (B, S, H) -> (B, nh, S, hd)
        return t.reshape(B, S, num_heads, hd).transpose(0, 2, 1, 3)

    q, k, v = heads(q), heads(k), heads(v)
    w = jnp.einsum('bhqd,bhkd->bhqk', q, k) / math.sqrt(hd)
    w = jax.nn.softmax(w, axis=-1)
    o = jnp.einsum('bhqk,bhkd->bhqd', w, v)
    o = o.transpose(0, 2, 1, 3).reshape(B, S, H)
    return o @ wout.T + bout


# ---------------- main ---------------------------------------------------------
if __name__ == "__main__":
    key = jax.random.PRNGKey(0)
    kx, k1, k2, k3, k4 = jax.random.split(key, 5)

    # Deterministic parameter init (uniform, like torch.nn.Linear default).
    bound = 1.0 / math.sqrt(HIDDEN_DIM)
    wqkv = jax.random.uniform(k1, (3 * HIDDEN_DIM, HIDDEN_DIM),
                              jnp.float32, -bound, bound)
    bqkv = jax.random.uniform(k2, (3 * HIDDEN_DIM,), jnp.float32, -bound, bound)
    wout = jax.random.uniform(k3, (HIDDEN_DIM, HIDDEN_DIM),
                              jnp.float32, -bound, bound)
    bout = jax.random.uniform(k4, (HIDDEN_DIM,), jnp.float32, -bound, bound)

    x = jax.random.normal(kx, (BATCH, SEQ, HIDDEN_DIM), jnp.float32)

    out = mha_forward(x, wqkv, bqkv, wout, bout)
    out = jax.block_until_ready(out)

    ref = mha_reference(x, wqkv, bqkv, wout, bout, NUM_HEADS)
    assert out.shape == (BATCH, SEQ, HIDDEN_DIM)
    max_err = float(jnp.max(jnp.abs(out - ref)))
    # Tolerance loosened slightly vs 1e-4 because of pl.reciprocal(approx=True).
    assert jnp.allclose(out, ref, atol=3e-3, rtol=3e-3), \
        f"mismatch vs reference (max abs err {max_err})"

    print("KERNEL_OK")
</pallas_src>

<mosaic_0001>
module attributes {stable_mosaic.version = 11 : i64} {
  func.func @mha_kernel(%arg0: memref<16x32xf32, #tpu.memory_space<vmem>>, %arg1: memref<4x32x8xf32, #tpu.memory_space<vmem>>, %arg2: memref<4x32x8xf32, #tpu.memory_space<vmem>>, %arg3: memref<4x32x8xf32, #tpu.memory_space<vmem>>, %arg4: memref<4x1x8xf32, #tpu.memory_space<vmem>>, %arg5: memref<4x1x8xf32, #tpu.memory_space<vmem>>, %arg6: memref<4x1x8xf32, #tpu.memory_space<vmem>>, %arg7: memref<4x8x128xf32, #tpu.memory_space<vmem>>, %arg8: memref<1x128xf32, #tpu.memory_space<vmem>>, %arg9: memref<16x128xf32, #tpu.memory_space<vmem>>) attributes {dimension_semantics = [], scalar_prefetch = 0 : i64, scratch_operands = 0 : i64, tpu.core_type = #tpu.core_type<tc>} {
    %c0 = arith.constant 0 : index
    %c0_0 = arith.constant 0 : index
    %0 = vector.load %arg0[%c0, %c0_0] : memref<16x32xf32, #tpu.memory_space<vmem>>, vector<16x32xf32>
    %cst = arith.constant 0.000000e+00 : f32
    %1 = vector.broadcast %cst : f32 to vector<16x128xf32>
    %c0_1 = arith.constant 0 : index
    %c0_2 = arith.constant 0 : index
    %c0_3 = arith.constant 0 : index
    %2 = vector.load %arg1[%c0_1, %c0_2, %c0_3] : memref<4x32x8xf32, #tpu.memory_space<vmem>>, vector<1x32x8xf32>
    %3 = vector.shape_cast %2 : vector<1x32x8xf32> to vector<32x8xf32>
    %cst_4 = arith.constant dense<0.000000e+00> : vector<16x8xf32>
    %4 = tpu.matmul %0, %3, %cst_4 {dimension_numbers = #tpu.dot_dimension_numbers<[1], [0], [0], [1], [0, 0, 1, 1], [], []>} : vector<16x32xf32>, vector<32x8xf32>, vector<16x8xf32> -> vector<16x8xf32>
    %c0_5 = arith.constant 0 : index
    %c0_6 = arith.constant 0 : index
    %c0_7 = arith.constant 0 : index
    %5 = vector.load %arg4[%c0_5, %c0_6, %c0_7] : memref<4x1x8xf32, #tpu.memory_space<vmem>>, vector<1x1x8xf32>
    %6 = vector.shape_cast %5 : vector<1x1x8xf32> to vector<1x8xf32>
    %7 = vector.broadcast %6 : vector<1x8xf32> to vector<16x8xf32>
    %8 = arith.addf %4, %7 : vector<16x8xf32>
    %c0_8 = arith.constant 0 : index
    %c0_9 = arith.constant 0 : index
    %c0_10 = arith.constant 0 : index
    %9 = vector.load %arg2[%c0_8, %c0_9, %c0_10] : memref<4x32x8xf32, #tpu.memory_space<vmem>>, vector<1x32x8xf32>
    %10 = vector.shape_cast %9 : vector<1x32x8xf32> to vector<32x8xf32>
    %cst_11 = arith.constant dense<0.000000e+00> : vector<16x8xf32>
    %11 = tpu.matmul %0, %10, %cst_11 {dimension_numbers = #tpu.dot_dimension_numbers<[1], [0], [0], [1], [0, 0, 1, 1], [], []>} : vector<16x32xf32>, vector<32x8xf32>, vector<16x8xf32> -> vector<16x8xf32>
    %c0_12 = arith.constant 0 : index
    %c0_13 = arith.constant 0 : index
    %c0_14 = arith.constant 0 : index
    %12 = vector.load %arg5[%c0_12, %c0_13, %c0_14] : memref<4x1x8xf32, #tpu.memory_space<vmem>>, vector<1x1x8xf32>
    %13 = vector.shape_cast %12 : vector<1x1x8xf32> to vector<1x8xf32>
    %14 = vector.broadcast %13 : vector<1x8xf32> to vector<16x8xf32>
    %15 = arith.addf %11, %14 : vector<16x8xf32>
    %c0_15 = arith.constant 0 : index
    %c0_16 = arith.constant 0 : index
    %c0_17 = arith.constant 0 : index
    %16 = vector.load %arg3[%c0_15, %c0_16, %c0_17] : memref<4x32x8xf32, #tpu.memory_space<vmem>>, vector<1x32x8xf32>
    %17 = vector.shape_cast %16 : vector<1x32x8xf32> to vector<32x8xf32>
    %cst_18 = arith.constant dense<0.000000e+00> : vector<16x8xf32>
    %18 = tpu.matmul %0, %17, %cst_18 {dimension_numbers = #tpu.dot_dimension_numbers<[1], [0], [0], [1], [0, 0, 1, 1], [], []>} : vector<16x32xf32>, vector<32x8xf32>, vector<16x8xf32> -> vector<16x8xf32>
    %c0_19 = arith.constant 0 : index
    %c0_20 = arith.constant 0 : index
    %c0_21 = arith.constant 0 : index
    %19 = vector.load %arg6[%c0_19, %c0_20, %c0_21] : memref<4x1x8xf32, #tpu.memory_space<vmem>>, vector<1x1x8xf32>
    %20 = vector.shape_cast %19 : vector<1x1x8xf32> to vector<1x8xf32>
    %21 = vector.broadcast %20 : vector<1x8xf32> to vector<16x8xf32>
    %22 = arith.addf %18, %21 : vector<16x8xf32>
    %cst_22 = arith.constant 0.353553385 : f32
    %23 = vector.broadcast %cst_22 : f32 to vector<16x8xf32>
    %24 = arith.mulf %8, %23 : vector<16x8xf32>
    %25 = vector.shape_cast %24 : vector<16x8xf32> to vector<2x8x8xf32>
    %26 = vector.shape_cast %15 : vector<16x8xf32> to vector<2x8x8xf32>
    %27 = vector.shape_cast %22 : vector<16x8xf32> to vector<2x8x8xf32>
    "tpu.trace_start"() <{level = 10 : i32, message = "bqd,bkd->bqk"}> : () -> ()
    %cst_23 = arith.constant dense<0.000000e+00> : vector<2x8x8xf32>
    %28 = tpu.matmul %25, %26, %cst_23 {dimension_numbers = #tpu.dot_dimension_numbers<[2], [2], [1], [1], [0, 0, 0, 1, 1, 1], [0], [0]>} : vector<2x8x8xf32>, vector<2x8x8xf32>, vector<2x8x8xf32> -> vector<2x8x8xf32>
    "tpu.trace_stop"() : () -> ()
    %cst_24 = arith.constant dense<0xFF800000> : vector<2x8xf32>
    %29 = vector.multi_reduction <maximumf>, %28, %cst_24 [2] : vector<2x8x8xf32> to vector<2x8xf32>
    %30 = vector.shape_cast %29 : vector<2x8xf32> to vector<2x8x1xf32>
    %31 = vector.broadcast %30 : vector<2x8x1xf32> to vector<2x8x8xf32>
    %32 = arith.subf %28, %31 : vector<2x8x8xf32>
    %33 = math.exp %32 : vector<2x8x8xf32>
    %cst_25 = arith.constant dense<0.000000e+00> : vector<2x8xf32>
    %34 = vector.multi_reduction <add>, %33, %cst_25 [2] : vector<2x8x8xf32> to vector<2x8xf32>
    %35 = vector.shape_cast %34 : vector<2x8xf32> to vector<2x8x1xf32>
    %36 = tpu.reciprocal %35 {approx = true} : vector<2x8x1xf32> -> vector<2x8x1xf32>
    %37 = vector.broadcast %36 : vector<2x8x1xf32> to vector<2x8x8xf32>
    %38 = arith.mulf %33, %37 : vector<2x8x8xf32>
    "tpu.trace_start"() <{level = 10 : i32, message = "bqk,bkd->bqd"}> : () -> ()
    %cst_26 = arith.constant dense<0.000000e+00> : vector<2x8x8xf32>
    %39 = tpu.matmul %38, %27, %cst_26 {dimension_numbers = #tpu.dot_dimension_numbers<[2], [1], [1], [2], [0, 0, 0, 1, 1, 2], [0], [0]>} : vector<2x8x8xf32>, vector<2x8x8xf32>, vector<2x8x8xf32> -> vector<2x8x8xf32>
    "tpu.trace_stop"() : () -> ()
    %40 = vector.shape_cast %39 : vector<2x8x8xf32> to vector<16x8xf32>
    %c0_27 = arith.constant 0 : index
    %c0_28 = arith.constant 0 : index
    %c0_29 = arith.constant 0 : index
    %41 = vector.load %arg7[%c0_27, %c0_28, %c0_29] : memref<4x8x128xf32, #tpu.memory_space<vmem>>, vector<1x8x128xf32>
    %42 = vector.shape_cast %41 : vector<1x8x128xf32> to vector<8x128xf32>
    %cst_30 = arith.constant dense<0.000000e+00> : vector<16x128xf32>
    %43 = tpu.matmul %40, %42, %cst_30 {dimension_numbers = #tpu.dot_dimension_numbers<[1], [0], [0], [1], [0, 0, 1, 1], [], []>} : vector<16x8xf32>, vector<8x128xf32>, vector<16x128xf32> -> vector<16x128xf32>
    %44 = arith.addf %1, %43 : vector<16x128xf32>
    %c1 = arith.constant 1 : index
    %c0_31 = arith.constant 0 : index
    %c0_32 = arith.constant 0 : index
    %45 = vector.load %arg1[%c1, %c0_31, %c0_32] : memref<4x32x8xf32, #tpu.memory_space<vmem>>, vector<1x32x8xf32>
    %46 = vector.shape_cast %45 : vector<1x32x8xf32> to vector<32x8xf32>
    %cst_33 = arith.constant dense<0.000000e+00> : vector<16x8xf32>
    %47 = tpu.matmul %0, %46, %cst_33 {dimension_numbers = #tpu.dot_dimension_numbers<[1], [0], [0], [1], [0, 0, 1, 1], [], []>} : vector<16x32xf32>, vector<32x8xf32>, vector<16x8xf32> -> vector<16x8xf32>
    %c1_34 = arith.constant 1 : index
    %c0_35 = arith.constant 0 : index
    %c0_36 = arith.constant 0 : index
    %48 = vector.load %arg4[%c1_34, %c0_35, %c0_36] : memref<4x1x8xf32, #tpu.memory_space<vmem>>, vector<1x1x8xf32>
    %49 = vector.shape_cast %48 : vector<1x1x8xf32> to vector<1x8xf32>
    %50 = vector.broadcast %49 : vector<1x8xf32> to vector<16x8xf32>
    %51 = arith.addf %47, %50 : vector<16x8xf32>
    %c1_37 = arith.constant 1 : index
    %c0_38 = arith.constant 0 : index
    %c0_39 = arith.constant 0 : index
    %52 = vector.load %arg2[%c1_37, %c0_38, %c0_39] : memref<4x32x8xf32, #tpu.memory_space<vmem>>, vector<1x32x8xf32>
    %53 = vector.shape_cast %52 : vector<1x32x8xf32> to vector<32x8xf32>
    %cst_40 = arith.constant dense<0.000000e+00> : vector<16x8xf32>
    %54 = tpu.matmul %0, %53, %cst_40 {dimension_numbers = #tpu.dot_dimension_numbers<[1], [0], [0], [1], [0, 0, 1, 1], [], []>} : vector<16x32xf32>, vector<32x8xf32>, vector<16x8xf32> -> vector<16x8xf32>
    %c1_41 = arith.constant 1 : index
    %c0_42 = arith.constant 0 : index
    %c0_43 = arith.constant 0 : index
    %55 = vector.load %arg5[%c1_41, %c0_42, %c0_43] : memref<4x1x8xf32, #tpu.memory_space<vmem>>, vector<1x1x8xf32>
    %56 = vector.shape_cast %55 : vector<1x1x8xf32> to vector<1x8xf32>
    %57 = vector.broadcast %56 : vector<1x8xf32> to vector<16x8xf32>
    %58 = arith.addf %54, %57 : vector<16x8xf32>
    %c1_44 = arith.constant 1 : index
    %c0_45 = arith.constant 0 : index
    %c0_46 = arith.constant 0 : index
    %59 = vector.load %arg3[%c1_44, %c0_45, %c0_46] : memref<4x32x8xf32, #tpu.memory_space<vmem>>, vector<1x32x8xf32>
    %60 = vector.shape_cast %59 : vector<1x32x8xf32> to vector<32x8xf32>
    %cst_47 = arith.constant dense<0.000000e+00> : vector<16x8xf32>
    %61 = tpu.matmul %0, %60, %cst_47 {dimension_numbers = #tpu.dot_dimension_numbers<[1], [0], [0], [1], [0, 0, 1, 1], [], []>} : vector<16x32xf32>, vector<32x8xf32>, vector<16x8xf32> -> vector<16x8xf32>
    %c1_48 = arith.constant 1 : index
    %c0_49 = arith.constant 0 : index
    %c0_50 = arith.constant 0 : index
    %62 = vector.load %arg6[%c1_48, %c0_49, %c0_50] : memref<4x1x8xf32, #tpu.memory_space<vmem>>, vector<1x1x8xf32>
    %63 = vector.shape_cast %62 : vector<1x1x8xf32> to vector<1x8xf32>
    %64 = vector.broadcast %63 : vector<1x8xf32> to vector<16x8xf32>
    %65 = arith.addf %61, %64 : vector<16x8xf32>
    %cst_51 = arith.constant 0.353553385 : f32
    %66 = vector.broadcast %cst_51 : f32 to vector<16x8xf32>
    %67 = arith.mulf %51, %66 : vector<16x8xf32>
    %68 = vector.shape_cast %67 : vector<16x8xf32> to vector<2x8x8xf32>
    %69 = vector.shape_cast %58 : vector<16x8xf32> to vector<2x8x8xf32>
    %70 = vector.shape_cast %65 : vector<16x8xf32> to vector<2x8x8xf32>
    "tpu.trace_start"() <{level = 10 : i32, message = "bqd,bkd->bqk"}> : () -> ()
    %cst_52 = arith.constant dense<0.000000e+00> : vector<2x8x8xf32>
    %71 = tpu.matmul %68, %69, %cst_52 {dimension_numbers = #tpu.dot_dimension_numbers<[2], [2], [1], [1], [0, 0, 0, 1, 1, 1], [0], [0]>} : vector<2x8x8xf32>, vector<2x8x8xf32>, vector<2x8x8xf32> -> vector<2x8x8xf32>
    "tpu.trace_stop"() : () -> ()
    %cst_53 = arith.constant dense<0xFF800000> : vector<2x8xf32>
    %72 = vector.multi_reduction <maximumf>, %71, %cst_53 [2] : vector<2x8x8xf32> to vector<2x8xf32>
    %73 = vector.shape_cast %72 : vector<2x8xf32> to vector<2x8x1xf32>
    %74 = vector.broadcast %73 : vector<2x8x1xf32> to vector<2x8x8xf32>
    %75 = arith.subf %71, %74 : vector<2x8x8xf32>
    %76 = math.exp %75 : vector<2x8x8xf32>
    %cst_54 = arith.constant dense<0.000000e+00> : vector<2x8xf32>
    %77 = vector.multi_reduction <add>, %76, %cst_54 [2] : vector<2x8x8xf32> to vector<2x8xf32>
    %78 = vector.shape_cast %77 : vector<2x8xf32> to vector<2x8x1xf32>
    %79 = tpu.reciprocal %78 {approx = true} : vector<2x8x1xf32> -> vector<2x8x1xf32>
    %80 = vector.broadcast %79 : vector<2x8x1xf32> to vector<2x8x8xf32>
    %81 = arith.mulf %76, %80 : vector<2x8x8xf32>
    "tpu.trace_start"() <{level = 10 : i32, message = "bqk,bkd->bqd"}> : () -> ()
    %cst_55 = arith.constant dense<0.000000e+00> : vector<2x8x8xf32>
    %82 = tpu.matmul %81, %70, %cst_55 {dimension_numbers = #tpu.dot_dimension_numbers<[2], [1], [1], [2], [0, 0, 0, 1, 1, 2], [0], [0]>} : vector<2x8x8xf32>, vector<2x8x8xf32>, vector<2x8x8xf32> -> vector<2x8x8xf32>
    "tpu.trace_stop"() : () -> ()
    %83 = vector.shape_cast %82 : vector<2x8x8xf32> to vector<16x8xf32>
    %c1_56 = arith.constant 1 : index
    %c0_57 = arith.constant 0 : index
    %c0_58 = arith.constant 0 : index
    %84 = vector.load %arg7[%c1_56, %c0_57, %c0_58] : memref<4x8x128xf32, #tpu.memory_space<vmem>>, vector<1x8x128xf32>
    %85 = vector.shape_cast %84 : vector<1x8x128xf32> to vector<8x128xf32>
    %cst_59 = arith.constant dense<0.000000e+00> : vector<16x128xf32>
    %86 = tpu.matmul %83, %85, %cst_59 {dimension_numbers = #tpu.dot_dimension_numbers<[1], [0], [0], [1], [0, 0, 1, 1], [], []>} : vector<16x8xf32>, vector<8x128xf32>, vector<16x128xf32> -> vector<16x128xf32>
    %87 = arith.addf %44, %86 : vector<16x128xf32>
    %c2 = arith.constant 2 : index
    %c0_60 = arith.constant 0 : index
    %c0_61 = arith.constant 0 : index
    %88 = vector.load %arg1[%c2, %c0_60, %c0_61] : memref<4x32x8xf32, #tpu.memory_space<vmem>>, vector<1x32x8xf32>
    %89 = vector.shape_cast %88 : vector<1x32x8xf32> to vector<32x8xf32>
    %cst_62 = arith.constant dense<0.000000e+00> : vector<16x8xf32>
    %90 = tpu.matmul %0, %89, %cst_62 {dimension_numbers = #tpu.dot_dimension_numbers<[1], [0], [0], [1], [0, 0, 1, 1], [], []>} : vector<16x32xf32>, vector<32x8xf32>, vector<16x8xf32> -> vector<16x8xf32>
    %c2_63 = arith.constant 2 : index
    %c0_64 = arith.constant 0 : index
    %c0_65 = arith.constant 0 : index
    %91 = vector.load %arg4[%c2_63, %c0_64, %c0_65] : memref<4x1x8xf32, #tpu.memory_space<vmem>>, vector<1x1x8xf32>
    %92 = vector.shape_cast %91 : vector<1x1x8xf32> to vector<1x8xf32>
    %93 = vector.broadcast %92 : vector<1x8xf32> to vector<16x8xf32>
    %94 = arith.addf %90, %93 : vector<16x8xf32>
    %c2_66 = arith.constant 2 : index
    %c0_67 = arith.constant 0 : index
    %c0_68 = arith.constant 0 : index
    %95 = vector.load %arg2[%c2_66, %c0_67, %c0_68] : memref<4x32x8xf32, #tpu.memory_space<vmem>>, vector<1x32x8xf32>
    %96 = vector.shape_cast %95 : vector<1x32x8xf32> to vector<32x8xf32>
    %cst_69 = arith.constant dense<0.000000e+00> : vector<16x8xf32>
    %97 = tpu.matmul %0, %96, %cst_69 {dimension_numbers = #tpu.dot_dimension_numbers<[1], [0], [0], [1], [0, 0, 1, 1], [], []>} : vector<16x32xf32>, vector<32x8xf32>, vector<16x8xf32> -> vector<16x8xf32>
    %c2_70 = arith.constant 2 : index
    %c0_71 = arith.constant 0 : index
    %c0_72 = arith.constant 0 : index
    %98 = vector.load %arg5[%c2_70, %c0_71, %c0_72] : memref<4x1x8xf32, #tpu.memory_space<vmem>>, vector<1x1x8xf32>
    %99 = vector.shape_cast %98 : vector<1x1x8xf32> to vector<1x8xf32>
    %100 = vector.broadcast %99 : vector<1x8xf32> to vector<16x8xf32>
    %101 = arith.addf %97, %100 : vector<16x8xf32>
    %c2_73 = arith.constant 2 : index
    %c0_74 = arith.constant 0 : index
    %c0_75 = arith.constant 0 : index
    %102 = vector.load %arg3[%c2_73, %c0_74, %c0_75] : memref<4x32x8xf32, #tpu.memory_space<vmem>>, vector<1x32x8xf32>
    %103 = vector.shape_cast %102 : vector<1x32x8xf32> to vector<32x8xf32>
    %cst_76 = arith.constant dense<0.000000e+00> : vector<16x8xf32>
    %104 = tpu.matmul %0, %103, %cst_76 {dimension_numbers = #tpu.dot_dimension_numbers<[1], [0], [0], [1], [0, 0, 1, 1], [], []>} : vector<16x32xf32>, vector<32x8xf32>, vector<16x8xf32> -> vector<16x8xf32>
    %c2_77 = arith.constant 2 : index
    %c0_78 = arith.constant 0 : index
    %c0_79 = arith.constant 0 : index
    %105 = vector.load %arg6[%c2_77, %c0_78, %c0_79] : memref<4x1x8xf32, #tpu.memory_space<vmem>>, vector<1x1x8xf32>
    %106 = vector.shape_cast %105 : vector<1x1x8xf32> to vector<1x8xf32>
    %107 = vector.broadcast %106 : vector<1x8xf32> to vector<16x8xf32>
    %108 = arith.addf %104, %107 : vector<16x8xf32>
    %cst_80 = arith.constant 0.353553385 : f32
    %109 = vector.broadcast %cst_80 : f32 to vector<16x8xf32>
    %110 = arith.mulf %94, %109 : vector<16x8xf32>
    %111 = vector.shape_cast %110 : vector<16x8xf32> to vector<2x8x8xf32>
    %112 = vector.shape_cast %101 : vector<16x8xf32> to vector<2x8x8xf32>
    %113 = vector.shape_cast %108 : vector<16x8xf32> to vector<2x8x8xf32>
    "tpu.trace_start"() <{level = 10 : i32, message = "bqd,bkd->bqk"}> : () -> ()
    %cst_81 = arith.constant dense<0.000000e+00> : vector<2x8x8xf32>
    %114 = tpu.matmul %111, %112, %cst_81 {dimension_numbers = #tpu.dot_dimension_numbers<[2], [2], [1], [1], [0, 0, 0, 1, 1, 1], [0], [0]>} : vector<2x8x8xf32>, vector<2x8x8xf32>, vector<2x8x8xf32> -> vector<2x8x8xf32>
    "tpu.trace_stop"() : () -> ()
    %cst_82 = arith.constant dense<0xFF800000> : vector<2x8xf32>
    %115 = vector.multi_reduction <maximumf>, %114, %cst_82 [2] : vector<2x8x8xf32> to vector<2x8xf32>
    %116 = vector.shape_cast %115 : vector<2x8xf32> to vector<2x8x1xf32>
    %117 = vector.broadcast %116 : vector<2x8x1xf32> to vector<2x8x8xf32>
    %118 = arith.subf %114, %117 : vector<2x8x8xf32>
    %119 = math.exp %118 : vector<2x8x8xf32>
    %cst_83 = arith.constant dense<0.000000e+00> : vector<2x8xf32>
    %120 = vector.multi_reduction <add>, %119, %cst_83 [2] : vector<2x8x8xf32> to vector<2x8xf32>
    %121 = vector.shape_cast %120 : vector<2x8xf32> to vector<2x8x1xf32>
    %122 = tpu.reciprocal %121 {approx = true} : vector<2x8x1xf32> -> vector<2x8x1xf32>
    %123 = vector.broadcast %122 : vector<2x8x1xf32> to vector<2x8x8xf32>
    %124 = arith.mulf %119, %123 : vector<2x8x8xf32>
    "tpu.trace_start"() <{level = 10 : i32, message = "bqk,bkd->bqd"}> : () -> ()
    %cst_84 = arith.constant dense<0.000000e+00> : vector<2x8x8xf32>
    %125 = tpu.matmul %124, %113, %cst_84 {dimension_numbers = #tpu.dot_dimension_numbers<[2], [1], [1], [2], [0, 0, 0, 1, 1, 2], [0], [0]>} : vector<2x8x8xf32>, vector<2x8x8xf32>, vector<2x8x8xf32> -> vector<2x8x8xf32>
    "tpu.trace_stop"() : () -> ()
    %126 = vector.shape_cast %125 : vector<2x8x8xf32> to vector<16x8xf32>
    %c2_85 = arith.constant 2 : index
    %c0_86 = arith.constant 0 : index
    %c0_87 = arith.constant 0 : index
    %127 = vector.load %arg7[%c2_85, %c0_86, %c0_87] : memref<4x8x128xf32, #tpu.memory_space<vmem>>, vector<1x8x128xf32>
    %128 = vector.shape_cast %127 : vector<1x8x128xf32> to vector<8x128xf32>
    %cst_88 = arith.constant dense<0.000000e+00> : vector<16x128xf32>
    %129 = tpu.matmul %126, %128, %cst_88 {dimension_numbers = #tpu.dot_dimension_numbers<[1], [0], [0], [1], [0, 0, 1, 1], [], []>} : vector<16x8xf32>, vector<8x128xf32>, vector<16x128xf32> -> vector<16x128xf32>
    %130 = arith.addf %87, %129 : vector<16x128xf32>
    %c3 = arith.constant 3 : index
    %c0_89 = arith.constant 0 : index
    %c0_90 = arith.constant 0 : index
    %131 = vector.load %arg1[%c3, %c0_89, %c0_90] : memref<4x32x8xf32, #tpu.memory_space<vmem>>, vector<1x32x8xf32>
    %132 = vector.shape_cast %131 : vector<1x32x8xf32> to vector<32x8xf32>
    %cst_91 = arith.constant dense<0.000000e+00> : vector<16x8xf32>
    %133 = tpu.matmul %0, %132, %cst_91 {dimension_numbers = #tpu.dot_dimension_numbers<[1], [0], [0], [1], [0, 0, 1, 1], [], []>} : vector<16x32xf32>, vector<32x8xf32>, vector<16x8xf32> -> vector<16x8xf32>
    %c3_92 = arith.constant 3 : index
    %c0_93 = arith.constant 0 : index
    %c0_94 = arith.constant 0 : index
    %134 = vector.load %arg4[%c3_92, %c0_93, %c0_94] : memref<4x1x8xf32, #tpu.memory_space<vmem>>, vector<1x1x8xf32>
    %135 = vector.shape_cast %134 : vector<1x1x8xf32> to vector<1x8xf32>
    %136 = vector.broadcast %135 : vector<1x8xf32> to vector<16x8xf32>
    %137 = arith.addf %133, %136 : vector<16x8xf32>
    %c3_95 = arith.constant 3 : index
    %c0_96 = arith.constant 0 : index
    %c0_97 = arith.constant 0 : index
    %138 = vector.load %arg2[%c3_95, %c0_96, %c0_97] : memref<4x32x8xf32, #tpu.memory_space<vmem>>, vector<1x32x8xf32>
    %139 = vector.shape_cast %138 : vector<1x32x8xf32> to vector<32x8xf32>
    %cst_98 = arith.constant dense<0.000000e+00> : vector<16x8xf32>
    %140 = tpu.matmul %0, %139, %cst_98 {dimension_numbers = #tpu.dot_dimension_numbers<[1], [0], [0], [1], [0, 0, 1, 1], [], []>} : vector<16x32xf32>, vector<32x8xf32>, vector<16x8xf32> -> vector<16x8xf32>
    %c3_99 = arith.constant 3 : index
    %c0_100 = arith.constant 0 : index
    %c0_101 = arith.constant 0 : index
    %141 = vector.load %arg5[%c3_99, %c0_100, %c0_101] : memref<4x1x8xf32, #tpu.memory_space<vmem>>, vector<1x1x8xf32>
    %142 = vector.shape_cast %141 : vector<1x1x8xf32> to vector<1x8xf32>
    %143 = vector.broadcast %142 : vector<1x8xf32> to vector<16x8xf32>
    %144 = arith.addf %140, %143 : vector<16x8xf32>
    %c3_102 = arith.constant 3 : index
    %c0_103 = arith.constant 0 : index
    %c0_104 = arith.constant 0 : index
    %145 = vector.load %arg3[%c3_102, %c0_103, %c0_104] : memref<4x32x8xf32, #tpu.memory_space<vmem>>, vector<1x32x8xf32>
    %146 = vector.shape_cast %145 : vector<1x32x8xf32> to vector<32x8xf32>
    %cst_105 = arith.constant dense<0.000000e+00> : vector<16x8xf32>
    %147 = tpu.matmul %0, %146, %cst_105 {dimension_numbers = #tpu.dot_dimension_numbers<[1], [0], [0], [1], [0, 0, 1, 1], [], []>} : vector<16x32xf32>, vector<32x8xf32>, vector<16x8xf32> -> vector<16x8xf32>
    %c3_106 = arith.constant 3 : index
    %c0_107 = arith.constant 0 : index
    %c0_108 = arith.constant 0 : index
    %148 = vector.load %arg6[%c3_106, %c0_107, %c0_108] : memref<4x1x8xf32, #tpu.memory_space<vmem>>, vector<1x1x8xf32>
    %149 = vector.shape_cast %148 : vector<1x1x8xf32> to vector<1x8xf32>
    %150 = vector.broadcast %149 : vector<1x8xf32> to vector<16x8xf32>
    %151 = arith.addf %147, %150 : vector<16x8xf32>
    %cst_109 = arith.constant 0.353553385 : f32
    %152 = vector.broadcast %cst_109 : f32 to vector<16x8xf32>
    %153 = arith.mulf %137, %152 : vector<16x8xf32>
    %154 = vector.shape_cast %153 : vector<16x8xf32> to vector<2x8x8xf32>
    %155 = vector.shape_cast %144 : vector<16x8xf32> to vector<2x8x8xf32>
    %156 = vector.shape_cast %151 : vector<16x8xf32> to vector<2x8x8xf32>
    "tpu.trace_start"() <{level = 10 : i32, message = "bqd,bkd->bqk"}> : () -> ()
    %cst_110 = arith.constant dense<0.000000e+00> : vector<2x8x8xf32>
    %157 = tpu.matmul %154, %155, %cst_110 {dimension_numbers = #tpu.dot_dimension_numbers<[2], [2], [1], [1], [0, 0, 0, 1, 1, 1], [0], [0]>} : vector<2x8x8xf32>, vector<2x8x8xf32>, vector<2x8x8xf32> -> vector<2x8x8xf32>
    "tpu.trace_stop"() : () -> ()
    %cst_111 = arith.constant dense<0xFF800000> : vector<2x8xf32>
    %158 = vector.multi_reduction <maximumf>, %157, %cst_111 [2] : vector<2x8x8xf32> to vector<2x8xf32>
    %159 = vector.shape_cast %158 : vector<2x8xf32> to vector<2x8x1xf32>
    %160 = vector.broadcast %159 : vector<2x8x1xf32> to vector<2x8x8xf32>
    %161 = arith.subf %157, %160 : vector<2x8x8xf32>
    %162 = math.exp %161 : vector<2x8x8xf32>
    %cst_112 = arith.constant dense<0.000000e+00> : vector<2x8xf32>
    %163 = vector.multi_reduction <add>, %162, %cst_112 [2] : vector<2x8x8xf32> to vector<2x8xf32>
    %164 = vector.shape_cast %163 : vector<2x8xf32> to vector<2x8x1xf32>
    %165 = tpu.reciprocal %164 {approx = true} : vector<2x8x1xf32> -> vector<2x8x1xf32>
    %166 = vector.broadcast %165 : vector<2x8x1xf32> to vector<2x8x8xf32>
    %167 = arith.mulf %162, %166 : vector<2x8x8xf32>
    "tpu.trace_start"() <{level = 10 : i32, message = "bqk,bkd->bqd"}> : () -> ()
    %cst_113 = arith.constant dense<0.000000e+00> : vector<2x8x8xf32>
    %168 = tpu.matmul %167, %156, %cst_113 {dimension_numbers = #tpu.dot_dimension_numbers<[2], [1], [1], [2], [0, 0, 0, 1, 1, 2], [0], [0]>} : vector<2x8x8xf32>, vector<2x8x8xf32>, vector<2x8x8xf32> -> vector<2x8x8xf32>
    "tpu.trace_stop"() : () -> ()
    %169 = vector.shape_cast %168 : vector<2x8x8xf32> to vector<16x8xf32>
    %c3_114 = arith.constant 3 : index
    %c0_115 = arith.constant 0 : index
    %c0_116 = arith.constant 0 : index
    %170 = vector.load %arg7[%c3_114, %c0_115, %c0_116] : memref<4x8x128xf32, #tpu.memory_space<vmem>>, vector<1x8x128xf32>
    %171 = vector.shape_cast %170 : vector<1x8x128xf32> to vector<8x128xf32>
    %cst_117 = arith.constant dense<0.000000e+00> : vector<16x128xf32>
    %172 = tpu.matmul %169, %171, %cst_117 {dimension_numbers = #tpu.dot_dimension_numbers<[1], [0], [0], [1], [0, 0, 1, 1], [], []>} : vector<16x8xf32>, vector<8x128xf32>, vector<16x128xf32> -> vector<16x128xf32>
    %173 = arith.addf %130, %172 : vector<16x128xf32>
    %c0_118 = arith.constant 0 : index
    %c0_119 = arith.constant 0 : index
    %174 = vector.load %arg8[%c0_118, %c0_119] : memref<1x128xf32, #tpu.memory_space<vmem>>, vector<1x128xf32>
    %175 = vector.broadcast %174 : vector<1x128xf32> to vector<16x128xf32>
    %176 = arith.addf %173, %175 : vector<16x128xf32>
    %c0_120 = arith.constant 0 : index
    %c0_121 = arith.constant 0 : index
    %177 = vector.load %arg9[%c0_120, %c0_121] : memref<16x128xf32, #tpu.memory_space<vmem>>, vector<16x128xf32>
    tpu.vector_store %arg9[%c0_120, %c0_121], %176 {strides = array<i32>} : memref<16x128xf32, #tpu.memory_space<vmem>>, vector<16x128xf32>,
    return
  }
}

</mosaic_0001>

<llo_original>
// kernel: tpu_custom_call.1
$region0: #{tpu_custom_call.1}
  #allocation0 [shape = 'u32[]', space=smem, size = 0x4, offset = 0x4, fixed_abs, tag = 'smem constant byte address 0x4 - core index']
  #allocation1 [shape = 'u32[144,128]{1,0:T(1,128)}', space=vmem, size = 0x12000, scoped, tag = 'internal scratch']
  %s0 = inlined_call_operand.vmem [shape: f32[16,32], index: 0, kind: input, shape index: {}]
  %s1 = inlined_call_operand.vmem [shape: f32[4,32,8], index: 1, kind: input, shape index: {}]
  %s2 = inlined_call_operand.vmem [shape: f32[4,32,8], index: 2, kind: input, shape index: {}]
  %s3 = inlined_call_operand.vmem [shape: f32[4,32,8], index: 3, kind: input, shape index: {}]
  %s4 = inlined_call_operand.vmem [shape: f32[4,1,8], index: 4, kind: input, shape index: {}]
  %s5 = inlined_call_operand.vmem [shape: f32[4,1,8], index: 5, kind: input, shape index: {}]
  %s6 = inlined_call_operand.vmem [shape: f32[4,1,8], index: 6, kind: input, shape index: {}]
  %s7 = inlined_call_operand.vmem [shape: f32[4,8,128], index: 7, kind: input, shape index: {}]
  %s8 = inlined_call_operand.vmem [shape: f32[1,128], index: 8, kind: input, shape index: {}]
  %s9 = inlined_call_operand.hbm [shape: f32[16,128], index: 9, kind: output, shape index: {}]
  %s10 = sld [smem:[#allocation0]]
  $region46: #{tpu_custom_call.1} parent=0
    _
  %s12 = ssub.s32 1, %s10
  %s13 = scalar_select 0, %s12, %s10
  $region1: #{tpu_custom_call.1} parent=0
    #allocation2 [shape = 'u8[8192]{0}', space=vmem, size = 0x2000, scoped, tag = 'output window, operand 0, single buffered']
    #allocation3 [shape = 's32[1]{0}', space=sflag, size = 0x4, scoped, tag = 'scoped memory for tpu_custom_call.1']
    %14 = vsyncpa [#allocation3], 0
    // Predicated region
    $region2: #{tpu_custom_call.1} parent=1 // pred_check
      _
    $region3: #{tpu_custom_call.1} parent=1 // pred_check_branch
      %16 = sbr.rel (0) target = $region5
    $region4: #{tpu_custom_call.1} parent=1 // pred_region
      _
    $region5: #{tpu_custom_call.1} parent=1 // pred_fallthru
      _
    // Predicated region
    $region6: #{tpu_custom_call.1} parent=1 // pred_check
      _
    $region7: #{tpu_custom_call.1} parent=1 // pred_check_branch
      %18 = sbr.rel (0) target = $region9
    $region8: #{tpu_custom_call.1} parent=1 // pred_region
      _
    $region9: #{tpu_custom_call.1} parent=1 // pred_fallthru
      _
    // Predicated region
    $region10: #{tpu_custom_call.1} parent=1 // pred_check
      _
    $region11: #{tpu_custom_call.1} parent=1 // pred_check_branch
      %20 = sbr.rel (0) target = $region13
    $region12: #{tpu_custom_call.1} parent=1 // pred_region
      _
    $region13: #{tpu_custom_call.1} parent=1 // pred_fallthru
      _
    // Predicated region
    $region14: #{tpu_custom_call.1} parent=1 // pred_check
      _
    $region15: #{tpu_custom_call.1} parent=1 // pred_check_branch
      %22 = sbr.rel (0) target = $region17
    $region16: #{tpu_custom_call.1} parent=1 // pred_region
      _
    $region17: #{tpu_custom_call.1} parent=1 // pred_fallthru
      _
    // Predicated region
    $region18: #{tpu_custom_call.1} parent=1 // pred_check
      _
    $region19: #{tpu_custom_call.1} parent=1 // pred_check_branch
      %24 = sbr.rel (0) target = $region21
    $region20: #{tpu_custom_call.1} parent=1 // pred_region
      _
    $region21: #{tpu_custom_call.1} parent=1 // pred_fallthru
      _
    // Predicated region
    $region22: #{tpu_custom_call.1} parent=1 // pred_check
      _
    $region23: #{tpu_custom_call.1} parent=1 // pred_check_branch
      %26 = sbr.rel (0) target = $region25
    $region24: #{tpu_custom_call.1} parent=1 // pred_region
      _
    $region25: #{tpu_custom_call.1} parent=1 // pred_fallthru
      _
    // Predicated region
    $region26: #{tpu_custom_call.1} parent=1 // pred_check
      _
    $region27: #{tpu_custom_call.1} parent=1 // pred_check_branch
      %28 = sbr.rel (0) target = $region29
    $region28: #{tpu_custom_call.1} parent=1 // pred_region
      _
    $region29: #{tpu_custom_call.1} parent=1 // pred_fallthru
      _
    // Predicated region
    $region30: #{tpu_custom_call.1} parent=1 // pred_check
      _
    $region31: #{tpu_custom_call.1} parent=1 // pred_check_branch
      %30 = sbr.rel (0) target = $region33
    $region32: #{tpu_custom_call.1} parent=1 // pred_region
      _
    $region33: #{tpu_custom_call.1} parent=1 // pred_fallthru
      _
    // Predicated region
    $region34: #{tpu_custom_call.1} parent=1 // pred_check
      _
    $region35: #{tpu_custom_call.1} parent=1 // pred_check_branch
      %32 = sbr.rel (0) target = $region37
    $region36: #{tpu_custom_call.1} parent=1 // pred_region
      _
    $region37: #{tpu_custom_call.1} parent=1 // pred_fallthru
      _
    %v33 = vld [vmem:[%s0] sm:$0xff]
    %v34 = vld [vmem:[%s0 + $0x8] sm:$0xff]
    %v35 = vld [vmem:[%s1] sm:$0xff]
    %v36 = vld [vmem:[%s1 + $0x8] sm:$0xff]
    %v37 = vld [vmem:[%s1 + $0x10] sm:$0xff]
    %v38 = vld [vmem:[%s1 + $0x18] sm:$0xff]
    %v39 = vld [vmem:[%s4] sm:$0x1]
    %v41 = vlaneseq
    %v42 = vshrl.u32 %v41, 7
    %v43 = vsub.s32 0, %v42
    %v44 = vrot.slane %v39, %v43
    %vm46 = vcmask 261120
    %v48 = vsel %vm46, %v33, 0
    %v51 = vsel %vm46, %v34, 0
    %53 = vmatprep.subr.mxu0 0.0
    %54 = vmatpush1.msra.mxu0 0.0
    %55 = vmatprep.subr.mxu0 0.0
    %56 = vmatpush1.msra.mxu0 0.0
    %57 = vmatprep.subr.mxu0 0.0
    %58 = vmatpush1.msra.mxu0 0.0
    %59 = vmatprep.subr.mxu0 0.0
    %60 = vmatpush1.msra.mxu0 0.0
    %61 = vmatprep.subr.mxu0 0.0
    %62 = vmatpush1.msra.mxu0 0.0
    %63 = vmatprep.subr.mxu0 0.0
    %64 = vmatpush1.msra.mxu0 0.0
    %65 = vmatprep.subr.mxu0 0.0
    %66 = vmatpush1.msra.mxu0 0.0
    %67 = vmatprep.subr.mxu0 0.0
    %68 = vmatpush1.msra.mxu0 0.0
    %69 = vmatprep.subr.mxu0 0.0
    %70 = vmatpush1.msra.mxu0 0.0
    %71 = vmatprep.subr.mxu0 0.0
    %72 = vmatpush1.msra.mxu0 0.0
    %73 = vmatprep.subr.mxu0 0.0
    %74 = vmatpush1.msra.mxu0 0.0
    %75 = vmatprep.subr.mxu0 0.0
    %76 = vmatpush1.msra.mxu0 0.0
    %77 = vmatprep.subr.mxu0 0.0
    %78 = vmatpush1.msra.mxu0 %v38
    %79 = vmatprep.subr.mxu0 0.0
    %80 = vmatpush1.msra.mxu0 %v37
    %81 = vmatprep.subr.mxu0 0.0
    %82 = vmatpush1.msra.mxu0 %v36
    %83 = vmatprep.subr.mxu0 0.0
    %84 = vmatpush1.msra.mxu0 %v35
    %85 = vmatprep.subr.mxu0 0.0
    %86 = vmatpush2.msra.mxu0 0.0
    %87 = vmatprep.subr.mxu0 0.0
    %88 = vmatpush2.msra.mxu0 0.0
    %89 = vmatprep.subr.mxu0 0.0
    %90 = vmatpush2.msra.mxu0 0.0
    %91 = vmatprep.subr.mxu0 0.0
    %92 = vmatpush2.msra.mxu0 0.0
    %93 = vmatprep.subr.mxu0 0.0
    %94 = vmatpush2.msra.mxu0 0.0
    %95 = vmatprep.subr.mxu0 0.0
    %96 = vmatpush2.msra.mxu0 0.0
    %97 = vmatprep.subr.mxu0 0.0
    %98 = vmatpush2.msra.mxu0 0.0
    %99 = vmatprep.subr.mxu0 0.0
    %100 = vmatpush2.msra.mxu0 0.0
    %101 = vmatprep.subr.mxu0 0.0
    %102 = vmatpush2.msra.mxu0 0.0
    %103 = vmatprep.subr.mxu0 0.0
    %104 = vmatpush2.msra.mxu0 0.0
    %105 = vmatprep.subr.mxu0 0.0
    %106 = vmatpush2.msra.mxu0 0.0
    %107 = vmatprep.subr.mxu0 0.0
    %108 = vmatpush2.msra.mxu0 0.0
    %109 = vmatprep.subr.mxu0 0.0
    %110 = vmatpush2.msra.mxu0 0.0
    %111 = vmatprep.subr.mxu0 0.0
    %112 = vmatpush2.msra.mxu0 0.0
    %113 = vmatprep.subr.mxu0 0.0
    %114 = vmatpush2.msra.mxu0 0.0
    %115 = vmatprep.subr.mxu0 0.0
    %116 = vmatpush2.msra.mxu0 0.0
    %117 = vmatprep.mubr.f32.mxu0 0.0
    %118 = vmatmul.mubr.f32.gmra.mxu0 %v48
    %v119 = vpop.f32.mrf.mxu0
    %v120 = vadd.f32 %v44, %v119
    %v121 = vpop.f32.mrf.mxu0
    %122 = vmatprep.mubr.f32.mxu0 0.0
    %123 = vmatmul.mubr.f32.gmra.mxu0 %v51
    %v124 = vpop.f32.mrf.mxu0
    %v125 = vadd.f32 %v44, %v124
    %v126 = vpop.f32.mrf.mxu0
    %127 = vdwg.mxu0
    %v128 = vld [vmem:[%s2] sm:$0xff]
    %v129 = vld [vmem:[%s2 + $0x8] sm:$0xff]
    %v130 = vld [vmem:[%s2 + $0x10] sm:$0xff]
    %v131 = vld [vmem:[%s2 + $0x18] sm:$0xff]
    %v132 = vld [vmem:[%s5] sm:$0x1]
    %v134 = vlaneseq
    %v135 = vshrl.u32 %v134, 7
    %v136 = vsub.s32 0, %v135
    %v137 = vrot.slane %v132, %v136
    %139 = vmatprep.subr.mxu0 0.0
    %140 = vmatpush1.msra.mxu0 0.0
    %141 = vmatprep.subr.mxu0 0.0
    %142 = vmatpush1.msra.mxu0 0.0
    %143 = vmatprep.subr.mxu0 0.0
    %144 = vmatpush1.msra.mxu0 0.0
    %145 = vmatprep.subr.mxu0 0.0
    %146 = vmatpush1.msra.mxu0 0.0
    %147 = vmatprep.subr.mxu0 0.0
    %148 = vmatpush1.msra.mxu0 0.0
    %149 = vmatprep.subr.mxu0 0.0
    %150 = vmatpush1.msra.mxu0 0.0
    %151 = vmatprep.subr.mxu0 0.0
    %152 = vmatpush1.msra.mxu0 0.0
    %153 = vmatprep.subr.mxu0 0.0
    %154 = vmatpush1.msra.mxu0 0.0
    %155 = vmatprep.subr.mxu0 0.0
    %156 = vmatpush1.msra.mxu0 0.0
    %157 = vmatprep.subr.mxu0 0.0
    %158 = vmatpush1.msra.mxu0 0.0
    %159 = vmatprep.subr.mxu0 0.0
    %160 = vmatpush1.msra.mxu0 0.0
    %161 = vmatprep.subr.mxu0 0.0
    %162 = vmatpush1.msra.mxu0 0.0
    %163 = vmatprep.subr.mxu0 0.0
    %164 = vmatpush1.msra.mxu0 %v131
    %165 = vmatprep.subr.mxu0 0.0
    %166 = vmatpush1.msra.mxu0 %v130
    %167 = vmatprep.subr.mxu0 0.0
    %168 = vmatpush1.msra.mxu0 %v129
    %169 = vmatprep.subr.mxu0 0.0
    %170 = vmatpush1.msra.mxu0 %v128
    %171 = vmatprep.subr.mxu0 0.0
    %172 = vmatpush2.msra.mxu0 0.0
    %173 = vmatprep.subr.mxu0 0.0
    %174 = vmatpush2.msra.mxu0 0.0
    %175 = vmatprep.subr.mxu0 0.0
    %176 = vmatpush2.msra.mxu0 0.0
    %177 = vmatprep.subr.mxu0 0.0
    %178 = vmatpush2.msra.mxu0 0.0
    %179 = vmatprep.subr.mxu0 0.0
    %180 = vmatpush2.msra.mxu0 0.0
    %181 = vmatprep.subr.mxu0 0.0
    %182 = vmatpush2.msra.mxu0 0.0
    %183 = vmatprep.subr.mxu0 0.0
    %184 = vmatpush2.msra.mxu0 0.0
    %185 = vmatprep.subr.mxu0 0.0
    %186 = vmatpush2.msra.mxu0 0.0
    %187 = vmatprep.subr.mxu0 0.0
    %188 = vmatpush2.msra.mxu0 0.0
    %189 = vmatprep.subr.mxu0 0.0
    %190 = vmatpush2.msra.mxu0 0.0
    %191 = vmatprep.subr.mxu0 0.0
    %192 = vmatpush2.msra.mxu0 0.0
    %193 = vmatprep.subr.mxu0 0.0
    %194 = vmatpush2.msra.mxu0 0.0
    %195 = vmatprep.subr.mxu0 0.0
    %196 = vmatpush2.msra.mxu0 0.0
    %197 = vmatprep.subr.mxu0 0.0
    %198 = vmatpush2.msra.mxu0 0.0
    %199 = vmatprep.subr.mxu0 0.0
    %200 = vmatpush2.msra.mxu0 0.0
    %201 = vmatprep.subr.mxu0 0.0
    %202 = vmatpush2.msra.mxu0 0.0
    %203 = vmatprep.mubr.f32.mxu0 0.0
    %204 = vmatmul.mubr.f32.gmra.mxu0 %v48
    %v205 = vpop.f32.mrf.mxu0
    %v206 = vadd.f32 %v137, %v205
    %v207 = vpop.f32.mrf.mxu0
    %208 = vmatprep.mubr.f32.mxu0 0.0
    %209 = vmatmul.mubr.f32.gmra.mxu0 %v51
    %v210 = vpop.f32.mrf.mxu0
    %v211 = vadd.f32 %v137, %v210
    %v212 = vpop.f32.mrf.mxu0
    %213 = vdwg.mxu0
    %v214 = vld [vmem:[%s3] sm:$0xff]
    %v215 = vld [vmem:[%s3 + $0x8] sm:$0xff]
    %v216 = vld [vmem:[%s3 + $0x10] sm:$0xff]
    %v217 = vld [vmem:[%s3 + $0x18] sm:$0xff]
    %v218 = vld [vmem:[%s6] sm:$0x1]
    %v220 = vlaneseq
    %v221 = vshrl.u32 %v220, 7
    %v222 = vsub.s32 0, %v221
    %v223 = vrot.slane %v218, %v222
    %225 = vmatprep.subr.mxu0 0.0
    %226 = vmatpush1.msra.mxu0 0.0
    %227 = vmatprep.subr.mxu0 0.0
    %228 = vmatpush1.msra.mxu0 0.0
    %229 = vmatprep.subr.mxu0 0.0
    %230 = vmatpush1.msra.mxu0 0.0
    %231 = vmatprep.subr.mxu0 0.0
    %232 = vmatpush1.msra.mxu0 0.0
    %233 = vmatprep.subr.mxu0 0.0
    %234 = vmatpush1.msra.mxu0 0.0
    %235 = vmatprep.subr.mxu0 0.0
    %236 = vmatpush1.msra.mxu0 0.0
    %237 = vmatprep.subr.mxu0 0.0
    %238 = vmatpush1.msra.mxu0 0.0
    %239 = vmatprep.subr.mxu0 0.0
    %240 = vmatpush1.msra.mxu0 0.0
    %241 = vmatprep.subr.mxu0 0.0
    %242 = vmatpush1.msra.mxu0 0.0
    %243 = vmatprep.subr.mxu0 0.0
    %244 = vmatpush1.msra.mxu0 0.0
    %245 = vmatprep.subr.mxu0 0.0
    %246 = vmatpush1.msra.mxu0 0.0
    %247 = vmatprep.subr.mxu0 0.0
    %248 = vmatpush1.msra.mxu0 0.0
    %249 = vmatprep.subr.mxu0 0.0
    %250 = vmatpush1.msra.mxu0 %v217
    %251 = vmatprep.subr.mxu0 0.0
    %252 = vmatpush1.msra.mxu0 %v216
    %253 = vmatprep.subr.mxu0 0.0
    %254 = vmatpush1.msra.mxu0 %v215
    %255 = vmatprep.subr.mxu0 0.0
    %256 = vmatpush1.msra.mxu0 %v214
    %257 = vmatprep.subr.mxu0 0.0
    %258 = vmatpush2.msra.mxu0 0.0
    %259 = vmatprep.subr.mxu0 0.0
    %260 = vmatpush2.msra.mxu0 0.0
    %261 = vmatprep.subr.mxu0 0.0
    %262 = vmatpush2.msra.mxu0 0.0
    %263 = vmatprep.subr.mxu0 0.0
    %264 = vmatpush2.msra.mxu0 0.0
    %265 = vmatprep.subr.mxu0 0.0
    %266 = vmatpush2.msra.mxu0 0.0
    %267 = vmatprep.subr.mxu0 0.0
    %268 = vmatpush2.msra.mxu0 0.0
    %269 = vmatprep.subr.mxu0 0.0
    %270 = vmatpush2.msra.mxu0 0.0
    %271 = vmatprep.subr.mxu0 0.0
    %272 = vmatpush2.msra.mxu0 0.0
    %273 = vmatprep.subr.mxu0 0.0
    %274 = vmatpush2.msra.mxu0 0.0
    %275 = vmatprep.subr.mxu0 0.0
    %276 = vmatpush2.msra.mxu0 0.0
    %277 = vmatprep.subr.mxu0 0.0
    %278 = vmatpush2.msra.mxu0 0.0
    %279 = vmatprep.subr.mxu0 0.0
    %280 = vmatpush2.msra.mxu0 0.0
    %281 = vmatprep.subr.mxu0 0.0
    %282 = vmatpush2.msra.mxu0 0.0
    %283 = vmatprep.subr.mxu0 0.0
    %284 = vmatpush2.msra.mxu0 0.0
    %285 = vmatprep.subr.mxu0 0.0
    %286 = vmatpush2.msra.mxu0 0.0
    %287 = vmatprep.subr.mxu0 0.0
    %288 = vmatpush2.msra.mxu0 0.0
    %289 = vmatprep.mubr.f32.mxu0 0.0
    %290 = vmatmul.mubr.f32.gmra.mxu0 %v48
    %v291 = vpop.f32.mrf.mxu0
    %v292 = vadd.f32 %v223, %v291
    %v293 = vpop.f32.mrf.mxu0
    %294 = vmatprep.mubr.f32.mxu0 0.0
    %295 = vmatmul.mubr.f32.gmra.mxu0 %v51
    %v296 = vpop.f32.mrf.mxu0
    %v297 = vadd.f32 %v223, %v296
    %v298 = vpop.f32.mrf.mxu0
    %299 = vdwg.mxu0
    %v300 = vmul.f32 %v120, 0.35355338
    %v301 = vmul.f32 %v125, 0.35355338
    %vm302 = vcmask 64512
    %v304 = vsel %vm302, %v300, 0
    %v307 = vsel %vm302, %v206, 0
    %309 = vmatprep.subr.mxu0 0.0
    %310 = vmatpush1.xpose.msra.mxu0 0.0
    %311 = vmatprep.subr.mxu0 0.0
    %312 = vmatpush1.xpose.msra.mxu0 0.0
    %313 = vmatprep.subr.mxu0 0.0
    %314 = vmatpush1.xpose.msra.mxu0 0.0
    %315 = vmatprep.subr.mxu0 0.0
    %316 = vmatpush1.xpose.msra.mxu0 0.0
    %317 = vmatprep.subr.mxu0 0.0
    %318 = vmatpush1.xpose.msra.mxu0 0.0
    %319 = vmatprep.subr.mxu0 0.0
    %320 = vmatpush1.xpose.msra.mxu0 0.0
    %321 = vmatprep.subr.mxu0 0.0
    %322 = vmatpush1.xpose.msra.mxu0 0.0
    %323 = vmatprep.subr.mxu0 0.0
    %324 = vmatpush1.xpose.msra.mxu0 0.0
    %325 = vmatprep.subr.mxu0 0.0
    %326 = vmatpush1.xpose.msra.mxu0 0.0
    %327 = vmatprep.subr.mxu0 0.0
    %328 = vmatpush1.xpose.msra.mxu0 0.0
    %329 = vmatprep.subr.mxu0 0.0
    %330 = vmatpush1.xpose.msra.mxu0 0.0
    %331 = vmatprep.subr.mxu0 0.0
    %332 = vmatpush1.xpose.msra.mxu0 0.0
    %333 = vmatprep.subr.mxu0 0.0
    %334 = vmatpush1.xpose.msra.mxu0 0.0
    %335 = vmatprep.subr.mxu0 0.0
    %336 = vmatpush1.xpose.msra.mxu0 0.0
    %337 = vmatprep.subr.mxu0 0.0
    %338 = vmatpush1.xpose.msra.mxu0 0.0
    %339 = vmatprep.subr.mxu0 0.0
    %340 = vmatpush1.xpose.msra.mxu0 %v307
    %341 = vmatprep.subr.mxu0 0.0
    %342 = vmatpush2.xpose.msra.mxu0 0.0
    %343 = vmatprep.subr.mxu0 0.0
    %344 = vmatpush2.xpose.msra.mxu0 0.0
    %345 = vmatprep.subr.mxu0 0.0
    %346 = vmatpush2.xpose.msra.mxu0 0.0
    %347 = vmatprep.subr.mxu0 0.0
    %348 = vmatpush2.xpose.msra.mxu0 0.0
    %349 = vmatprep.subr.mxu0 0.0
    %350 = vmatpush2.xpose.msra.mxu0 0.0
    %351 = vmatprep.subr.mxu0 0.0
    %352 = vmatpush2.xpose.msra.mxu0 0.0
    %353 = vmatprep.subr.mxu0 0.0
    %354 = vmatpush2.xpose.msra.mxu0 0.0
    %355 = vmatprep.subr.mxu0 0.0
    %356 = vmatpush2.xpose.msra.mxu0 0.0
    %357 = vmatprep.subr.mxu0 0.0
    %358 = vmatpush2.xpose.msra.mxu0 0.0
    %359 = vmatprep.subr.mxu0 0.0
    %360 = vmatpush2.xpose.msra.mxu0 0.0
    %361 = vmatprep.subr.mxu0 0.0
    %362 = vmatpush2.xpose.msra.mxu0 0.0
    %363 = vmatprep.subr.mxu0 0.0
    %364 = vmatpush2.xpose.msra.mxu0 0.0
    %365 = vmatprep.subr.mxu0 0.0
    %366 = vmatpush2.xpose.msra.mxu0 0.0
    %367 = vmatprep.subr.mxu0 0.0
    %368 = vmatpush2.xpose.msra.mxu0 0.0
    %369 = vmatprep.subr.mxu0 0.0
    %370 = vmatpush2.xpose.msra.mxu0 0.0
    %371 = vmatprep.subr.mxu0 0.0
    %372 = vmatpush2.xpose.msra.mxu0 0.0
    %373 = vmatprep.mubr.f32.mxu0 0.0
    %374 = vmatmul.mubr.f32.gmra.mxu0 %v304
    %v375 = vpop.f32.mrf.mxu0
    %v376 = vadd.f32 0.0, %v375
    %v377 = vpop.f32.mrf.mxu0
    %378 = vdwg.mxu0
    %v380 = vsel %vm302, %v301, 0
    %v383 = vsel %vm302, %v211, 0
    %385 = vmatprep.subr.mxu0 0.0
    %386 = vmatpush1.xpose.msra.mxu0 0.0
    %387 = vmatprep.subr.mxu0 0.0
    %388 = vmatpush1.xpose.msra.mxu0 0.0
    %389 = vmatprep.subr.mxu0 0.0
    %390 = vmatpush1.xpose.msra.mxu0 0.0
    %391 = vmatprep.subr.mxu0 0.0
    %392 = vmatpush1.xpose.msra.mxu0 0.0
    %393 = vmatprep.subr.mxu0 0.0
    %394 = vmatpush1.xpose.msra.mxu0 0.0
    %395 = vmatprep.subr.mxu0 0.0
    %396 = vmatpush1.xpose.msra.mxu0 0.0
    %397 = vmatprep.subr.mxu0 0.0
    %398 = vmatpush1.xpose.msra.mxu0 0.0
    %399 = vmatprep.subr.mxu0 0.0
    %400 = vmatpush1.xpose.msra.mxu0 0.0
    %401 = vmatprep.subr.mxu0 0.0
    %402 = vmatpush1.xpose.msra.mxu0 0.0
    %403 = vmatprep.subr.mxu0 0.0
    %404 = vmatpush1.xpose.msra.mxu0 0.0
    %405 = vmatprep.subr.mxu0 0.0
    %406 = vmatpush1.xpose.msra.mxu0 0.0
    %407 = vmatprep.subr.mxu0 0.0
    %408 = vmatpush1.xpose.msra.mxu0 0.0
    %409 = vmatprep.subr.mxu0 0.0
    %410 = vmatpush1.xpose.msra.mxu0 0.0
    %411 = vmatprep.subr.mxu0 0.0
    %412 = vmatpush1.xpose.msra.mxu0 0.0
    %413 = vmatprep.subr.mxu0 0.0
    %414 = vmatpush1.xpose.msra.mxu0 0.0
    %415 = vmatprep.subr.mxu0 0.0
    %416 = vmatpush1.xpose.msra.mxu0 %v383
    %417 = vmatprep.subr.mxu0 0.0
    %418 = vmatpush2.xpose.msra.mxu0 0.0
    %419 = vmatprep.subr.mxu0 0.0
    %420 = vmatpush2.xpose.msra.mxu0 0.0
    %421 = vmatprep.subr.mxu0 0.0
    %422 = vmatpush2.xpose.msra.mxu0 0.0
    %423 = vmatprep.subr.mxu0 0.0
    %424 = vmatpush2.xpose.msra.mxu0 0.0
    %425 = vmatprep.subr.mxu0 0.0
    %426 = vmatpush2.xpose.msra.mxu0 0.0
    %427 = vmatprep.subr.mxu0 0.0
    %428 = vmatpush2.xpose.msra.mxu0 0.0
    %429 = vmatprep.subr.mxu0 0.0
    %430 = vmatpush2.xpose.msra.mxu0 0.0
    %431 = vmatprep.subr.mxu0 0.0
    %432 = vmatpush2.xpose.msra.mxu0 0.0
    %433 = vmatprep.subr.mxu0 0.0
    %434 = vmatpush2.xpose.msra.mxu0 0.0
    %435 = vmatprep.subr.mxu0 0.0
    %436 = vmatpush2.xpose.msra.mxu0 0.0
    %437 = vmatprep.subr.mxu0 0.0
    %438 = vmatpush2.xpose.msra.mxu0 0.0
    %439 = vmatprep.subr.mxu0 0.0
    %440 = vmatpush2.xpose.msra.mxu0 0.0
    %441 = vmatprep.subr.mxu0 0.0
    %442 = vmatpush2.xpose.msra.mxu0 0.0
    %443 = vmatprep.subr.mxu0 0.0
    %444 = vmatpush2.xpose.msra.mxu0 0.0
    %445 = vmatprep.subr.mxu0 0.0
    %446 = vmatpush2.xpose.msra.mxu0 0.0
    %447 = vmatprep.subr.mxu0 0.0
    %448 = vmatpush2.xpose.msra.mxu0 0.0
    %449 = vmatprep.mubr.f32.mxu0 0.0
    %450 = vmatmul.mubr.f32.gmra.mxu0 %v380
    %v451 = vpop.f32.mrf.mxu0
    %v452 = vadd.f32 0.0, %v451
    %v453 = vpop.f32.mrf.mxu0
    %454 = vdwg.mxu0
    %v455 = vsel %vm302, %v376, -inf
    %456 = vmax.xlane.f32.xlu0 %v455
    %v457 = vpop.xlane.xlu0 %456
    %v458 = vsel %vm302, %v452, -inf
    %459 = vmax.xlane.f32.xlu0 %v458
    %v460 = vpop.xlane.xlu0 %459
    %v461 = vsub.f32 %v376, %v457
    %v462 = vsub.f32 %v452, %v460
    %v463 = vmul.f32 %v461, 1.442695
    %v464 = vpow.pop %v463
    %v465 = vmul.f32 %v462, 1.442695
    %v466 = vpow.pop %v465
    %v467 = vsel %vm302, %v464, 0.0
    %468 = vadd.xlane.f32.xlu0 %v467
    %v469 = vpop.xlane.xlu0 %468
    %v470 = vsel %vm302, %v466, 0.0
    %471 = vadd.xlane.f32.xlu0 %v470
    %v472 = vpop.xlane.xlu0 %471
    %v473 = vrcp.pop %v469
    %v474 = vrcp.pop %v472
    %v475 = vmul.f32 %v464, %v473
    %v476 = vmul.f32 %v466, %v474
    %v478 = vsel %vm302, %v475, 0
    %480 = vmatprep.subr.mxu0 0.0
    %481 = vmatpush1.msra.mxu0 0.0
    %482 = vmatprep.subr.mxu0 0.0
    %483 = vmatpush1.msra.mxu0 0.0
    %484 = vmatprep.subr.mxu0 0.0
    %485 = vmatpush1.msra.mxu0 0.0
    %486 = vmatprep.subr.mxu0 0.0
    %487 = vmatpush1.msra.mxu0 0.0
    %488 = vmatprep.subr.mxu0 0.0
    %489 = vmatpush1.msra.mxu0 0.0
    %490 = vmatprep.subr.mxu0 0.0
    %491 = vmatpush1.msra.mxu0 0.0
    %492 = vmatprep.subr.mxu0 0.0
    %493 = vmatpush1.msra.mxu0 0.0
    %494 = vmatprep.subr.mxu0 0.0
    %495 = vmatpush1.msra.mxu0 0.0
    %496 = vmatprep.subr.mxu0 0.0
    %497 = vmatpush1.msra.mxu0 0.0
    %498 = vmatprep.subr.mxu0 0.0
    %499 = vmatpush1.msra.mxu0 0.0
    %500 = vmatprep.subr.mxu0 0.0
    %501 = vmatpush1.msra.mxu0 0.0
    %502 = vmatprep.subr.mxu0 0.0
    %503 = vmatpush1.msra.mxu0 0.0
    %504 = vmatprep.subr.mxu0 0.0
    %505 = vmatpush1.msra.mxu0 0.0
    %506 = vmatprep.subr.mxu0 0.0
    %507 = vmatpush1.msra.mxu0 0.0
    %508 = vmatprep.subr.mxu0 0.0
    %509 = vmatpush1.msra.mxu0 0.0
    %510 = vmatprep.subr.mxu0 0.0
    %511 = vmatpush1.msra.mxu0 %v292
    %512 = vmatprep.subr.mxu0 0.0
    %513 = vmatpush2.msra.mxu0 0.0
    %514 = vmatprep.subr.mxu0 0.0
    %515 = vmatpush2.msra.mxu0 0.0
    %516 = vmatprep.subr.mxu0 0.0
    %517 = vmatpush2.msra.mxu0 0.0
    %518 = vmatprep.subr.mxu0 0.0
    %519 = vmatpush2.msra.mxu0 0.0
    %520 = vmatprep.subr.mxu0 0.0
    %521 = vmatpush2.msra.mxu0 0.0
    %522 = vmatprep.subr.mxu0 0.0
    %523 = vmatpush2.msra.mxu0 0.0
    %524 = vmatprep.subr.mxu0 0.0
    %525 = vmatpush2.msra.mxu0 0.0
    %526 = vmatprep.subr.mxu0 0.0
    %527 = vmatpush2.msra.mxu0 0.0
    %528 = vmatprep.subr.mxu0 0.0
    %529 = vmatpush2.msra.mxu0 0.0
    %530 = vmatprep.subr.mxu0 0.0
    %531 = vmatpush2.msra.mxu0 0.0
    %532 = vmatprep.subr.mxu0 0.0
    %533 = vmatpush2.msra.mxu0 0.0
    %534 = vmatprep.subr.mxu0 0.0
    %535 = vmatpush2.msra.mxu0 0.0
    %536 = vmatprep.subr.mxu0 0.0
    %537 = vmatpush2.msra.mxu0 0.0
    %538 = vmatprep.subr.mxu0 0.0
    %539 = vmatpush2.msra.mxu0 0.0
    %540 = vmatprep.subr.mxu0 0.0
    %541 = vmatpush2.msra.mxu0 0.0
    %542 = vmatprep.subr.mxu0 0.0
    %543 = vmatpush2.msra.mxu0 0.0
    %544 = vmatprep.mubr.f32.mxu0 0.0
    %545 = vmatmul.mubr.f32.gmra.mxu0 %v478
    %v546 = vpop.f32.mrf.mxu0
    %v547 = vadd.f32 0.0, %v546
    %v548 = vpop.f32.mrf.mxu0
    %549 = vdwg.mxu0
    %v551 = vsel %vm302, %v476, 0
    %553 = vmatprep.subr.mxu0 0.0
    %554 = vmatpush1.msra.mxu0 0.0
    %555 = vmatprep.subr.mxu0 0.0
    %556 = vmatpush1.msra.mxu0 0.0
    %557 = vmatprep.subr.mxu0 0.0
    %558 = vmatpush1.msra.mxu0 0.0
    %559 = vmatprep.subr.mxu0 0.0
    %560 = vmatpush1.msra.mxu0 0.0
    %561 = vmatprep.subr.mxu0 0.0
    %562 = vmatpush1.msra.mxu0 0.0
    %563 = vmatprep.subr.mxu0 0.0
    %564 = vmatpush1.msra.mxu0 0.0
    %565 = vmatprep.subr.mxu0 0.0
    %566 = vmatpush1.msra.mxu0 0.0
    %567 = vmatprep.subr.mxu0 0.0
    %568 = vmatpush1.msra.mxu0 0.0
    %569 = vmatprep.subr.mxu0 0.0
    %570 = vmatpush1.msra.mxu0 0.0
    %571 = vmatprep.subr.mxu0 0.0
    %572 = vmatpush1.msra.mxu0 0.0
    %573 = vmatprep.subr.mxu0 0.0
    %574 = vmatpush1.msra.mxu0 0.0
    %575 = vmatprep.subr.mxu0 0.0
    %576 = vmatpush1.msra.mxu0 0.0
    %577 = vmatprep.subr.mxu0 0.0
    %578 = vmatpush1.msra.mxu0 0.0
    %579 = vmatprep.subr.mxu0 0.0
    %580 = vmatpush1.msra.mxu0 0.0
    %581 = vmatprep.subr.mxu0 0.0
    %582 = vmatpush1.msra.mxu0 0.0
    %583 = vmatprep.subr.mxu0 0.0
    %584 = vmatpush1.msra.mxu0 %v297
    %585 = vmatprep.subr.mxu0 0.0
    %586 = vmatpush2.msra.mxu0 0.0
    %587 = vmatprep.subr.mxu0 0.0
    %588 = vmatpush2.msra.mxu0 0.0
    %589 = vmatprep.subr.mxu0 0.0
    %590 = vmatpush2.msra.mxu0 0.0
    %591 = vmatprep.subr.mxu0 0.0
    %592 = vmatpush2.msra.mxu0 0.0
    %593 = vmatprep.subr.mxu0 0.0
    %594 = vmatpush2.msra.mxu0 0.0
    %595 = vmatprep.subr.mxu0 0.0
    %596 = vmatpush2.msra.mxu0 0.0
    %597 = vmatprep.subr.mxu0 0.0
    %598 = vmatpush2.msra.mxu0 0.0
    %599 = vmatprep.subr.mxu0 0.0
    %600 = vmatpush2.msra.mxu0 0.0
    %601 = vmatprep.subr.mxu0 0.0
    %602 = vmatpush2.msra.mxu0 0.0
    %603 = vmatprep.subr.mxu0 0.0
    %604 = vmatpush2.msra.mxu0 0.0
    %605 = vmatprep.subr.mxu0 0.0
    %606 = vmatpush2.msra.mxu0 0.0
    %607 = vmatprep.subr.mxu0 0.0
    %608 = vmatpush2.msra.mxu0 0.0
    %609 = vmatprep.subr.mxu0 0.0
    %610 = vmatpush2.msra.mxu0 0.0
    %611 = vmatprep.subr.mxu0 0.0
    %612 = vmatpush2.msra.mxu0 0.0
    %613 = vmatprep.subr.mxu0 0.0
    %614 = vmatpush2.msra.mxu0 0.0
    %615 = vmatprep.subr.mxu0 0.0
    %616 = vmatpush2.msra.mxu0 0.0
    %617 = vmatprep.mubr.f32.mxu0 0.0
    %618 = vmatmul.mubr.f32.gmra.mxu0 %v551
    %v619 = vpop.f32.mrf.mxu0
    %v620 = vadd.f32 0.0, %v619
    %v621 = vpop.f32.mrf.mxu0
    %622 = vdwg.mxu0
    %v623 = vld [vmem:[%s7] sm:$0xff]
    %s624 = scalar_lea.vmem %s1, 32
    %v625 = vld [vmem:[%s624] sm:$0xff]
    %v626 = vld [vmem:[%s624 + $0x8] sm:$0xff]
    %v627 = vld [vmem:[%s624 + $0x10] sm:$0xff]
    %v628 = vld [vmem:[%s624 + $0x18] sm:$0xff]
    %s629 = scalar_lea.vmem %s4, 1
    %v630 = vld [vmem:[%s629] sm:$0x1]
    %v632 = vlaneseq
    %v633 = vshrl.u32 %v632, 7
    %v634 = vsub.s32 0, %v633
    %v635 = vrot.slane %v630, %v634
    %637 = vmatprep.subr.mxu0 0.0
    %638 = vmatpush1.msra.mxu0 0.0
    %639 = vmatprep.subr.mxu0 0.0
    %640 = vmatpush1.msra.mxu0 0.0
    %641 = vmatprep.subr.mxu0 0.0
    %642 = vmatpush1.msra.mxu0 0.0
    %643 = vmatprep.subr.mxu0 0.0
    %644 = vmatpush1.msra.mxu0 0.0
    %645 = vmatprep.subr.mxu0 0.0
    %646 = vmatpush1.msra.mxu0 0.0
    %647 = vmatprep.subr.mxu0 0.0
    %648 = vmatpush1.msra.mxu0 0.0
    %649 = vmatprep.subr.mxu0 0.0
    %650 = vmatpush1.msra.mxu0 0.0
    %651 = vmatprep.subr.mxu0 0.0
    %652 = vmatpush1.msra.mxu0 0.0
    %653 = vmatprep.subr.mxu0 0.0
    %654 = vmatpush1.msra.mxu0 0.0
    %655 = vmatprep.subr.mxu0 0.0
    %656 = vmatpush1.msra.mxu0 0.0
    %657 = vmatprep.subr.mxu0 0.0
    %658 = vmatpush1.msra.mxu0 0.0
    %659 = vmatprep.subr.mxu0 0.0
    %660 = vmatpush1.msra.mxu0 0.0
    %661 = vmatprep.subr.mxu0 0.0
    %662 = vmatpush1.msra.mxu0 %v628
    %663 = vmatprep.subr.mxu0 0.0
    %664 = vmatpush1.msra.mxu0 %v627
    %665 = vmatprep.subr.mxu0 0.0
    %666 = vmatpush1.msra.mxu0 %v626
    %667 = vmatprep.subr.mxu0 0.0
    %668 = vmatpush1.msra.mxu0 %v625
    %669 = vmatprep.subr.mxu0 0.0
    %670 = vmatpush2.msra.mxu0 0.0
    %671 = vmatprep.subr.mxu0 0.0
    %672 = vmatpush2.msra.mxu0 0.0
    %673 = vmatprep.subr.mxu0 0.0
    %674 = vmatpush2.msra.mxu0 0.0
    %675 = vmatprep.subr.mxu0 0.0
    %676 = vmatpush2.msra.mxu0 0.0
    %677 = vmatprep.subr.mxu0 0.0
    %678 = vmatpush2.msra.mxu0 0.0
    %679 = vmatprep.subr.mxu0 0.0
    %680 = vmatpush2.msra.mxu0 0.0
    %681 = vmatprep.subr.mxu0 0.0
    %682 = vmatpush2.msra.mxu0 0.0
    %683 = vmatprep.subr.mxu0 0.0
    %684 = vmatpush2.msra.mxu0 0.0
    %685 = vmatprep.subr.mxu0 0.0
    %686 = vmatpush2.msra.mxu0 0.0
    %687 = vmatprep.subr.mxu0 0.0
    %688 = vmatpush2.msra.mxu0 0.0
    %689 = vmatprep.subr.mxu0 0.0
    %690 = vmatpush2.msra.mxu0 0.0
    %691 = vmatprep.subr.mxu0 0.0
    %692 = vmatpush2.msra.mxu0 0.0
    %693 = vmatprep.subr.mxu0 0.0
    %694 = vmatpush2.msra.mxu0 0.0
    %695 = vmatprep.subr.mxu0 0.0
    %696 = vmatpush2.msra.mxu0 0.0
    %697 = vmatprep.subr.mxu0 0.0
    %698 = vmatpush2.msra.mxu0 0.0
    %699 = vmatprep.subr.mxu0 0.0
    %700 = vmatpush2.msra.mxu0 0.0
    %701 = vmatprep.mubr.f32.mxu0 0.0
    %702 = vmatmul.mubr.f32.gmra.mxu0 %v48
    %v703 = vpop.f32.mrf.mxu0
    %v704 = vadd.f32 %v635, %v703
    %v705 = vpop.f32.mrf.mxu0
    %706 = vmatprep.mubr.f32.mxu0 0.0
    %707 = vmatmul.mubr.f32.gmra.mxu0 %v51
    %v708 = vpop.f32.mrf.mxu0
    %v709 = vadd.f32 %v635, %v708
    %v710 = vpop.f32.mrf.mxu0
    %711 = vdwg.mxu0
    %s712 = scalar_lea.vmem %s2, 32
    %v713 = vld [vmem:[%s712] sm:$0xff]
    %v714 = vld [vmem:[%s712 + $0x8] sm:$0xff]
    %v715 = vld [vmem:[%s712 + $0x10] sm:$0xff]
    %v716 = vld [vmem:[%s712 + $0x18] sm:$0xff]
    %s717 = scalar_lea.vmem %s5, 1
    %v718 = vld [vmem:[%s717] sm:$0x1]
    %v720 = vlaneseq
    %v721 = vshrl.u32 %v720, 7
    %v722 = vsub.s32 0, %v721
    %v723 = vrot.slane %v718, %v722
    %725 = vmatprep.subr.mxu0 0.0
    %726 = vmatpush1.msra.mxu0 0.0
    %727 = vmatprep.subr.mxu0 0.0
    %728 = vmatpush1.msra.mxu0 0.0
    %729 = vmatprep.subr.mxu0 0.0
    %730 = vmatpush1.msra.mxu0 0.0
    %731 = vmatprep.subr.mxu0 0.0
    %732 = vmatpush1.msra.mxu0 0.0
    %733 = vmatprep.subr.mxu0 0.0
    %734 = vmatpush1.msra.mxu0 0.0
    %735 = vmatprep.subr.mxu0 0.0
    %736 = vmatpush1.msra.mxu0 0.0
    %737 = vmatprep.subr.mxu0 0.0
    %738 = vmatpush1.msra.mxu0 0.0
    %739 = vmatprep.subr.mxu0 0.0
    %740 = vmatpush1.msra.mxu0 0.0
    %741 = vmatprep.subr.mxu0 0.0
    %742 = vmatpush1.msra.mxu0 0.0
    %743 = vmatprep.subr.mxu0 0.0
    %744 = vmatpush1.msra.mxu0 0.0
    %745 = vmatprep.subr.mxu0 0.0
    %746 = vmatpush1.msra.mxu0 0.0
    %747 = vmatprep.subr.mxu0 0.0
    %748 = vmatpush1.msra.mxu0 0.0
    %749 = vmatprep.subr.mxu0 0.0
    %750 = vmatpush1.msra.mxu0 %v716
    %751 = vmatprep.subr.mxu0 0.0
    %752 = vmatpush1.msra.mxu0 %v715
    %753 = vmatprep.subr.mxu0 0.0
    %754 = vmatpush1.msra.mxu0 %v714
    %755 = vmatprep.subr.mxu0 0.0
    %756 = vmatpush1.msra.mxu0 %v713
    %757 = vmatprep.subr.mxu0 0.0
    %758 = vmatpush2.msra.mxu0 0.0
    %759 = vmatprep.subr.mxu0 0.0
    %760 = vmatpush2.msra.mxu0 0.0
    %761 = vmatprep.subr.mxu0 0.0
    %762 = vmatpush2.msra.mxu0 0.0
    %763 = vmatprep.subr.mxu0 0.0
    %764 = vmatpush2.msra.mxu0 0.0
    %765 = vmatprep.subr.mxu0 0.0
    %766 = vmatpush2.msra.mxu0 0.0
    %767 = vmatprep.subr.mxu0 0.0
    %768 = vmatpush2.msra.mxu0 0.0
    %769 = vmatprep.subr.mxu0 0.0
    %770 = vmatpush2.msra.mxu0 0.0
    %771 = vmatprep.subr.mxu0 0.0
    %772 = vmatpush2.msra.mxu0 0.0
    %773 = vmatprep.subr.mxu0 0.0
    %774 = vmatpush2.msra.mxu0 0.0
    %775 = vmatprep.subr.mxu0 0.0
    %776 = vmatpush2.msra.mxu0 0.0
    %777 = vmatprep.subr.mxu0 0.0
    %778 = vmatpush2.msra.mxu0 0.0
    %779 = vmatprep.subr.mxu0 0.0
    %780 = vmatpush2.msra.mxu0 0.0
    %781 = vmatprep.subr.mxu0 0.0
    %782 = vmatpush2.msra.mxu0 0.0
    %783 = vmatprep.subr.mxu0 0.0
    %784 = vmatpush2.msra.mxu0 0.0
    %785 = vmatprep.subr.mxu0 0.0
    %786 = vmatpush2.msra.mxu0 0.0
    %787 = vmatprep.subr.mxu0 0.0
    %788 = vmatpush2.msra.mxu0 0.0
    %789 = vmatprep.mubr.f32.mxu0 0.0
    %790 = vmatmul.mubr.f32.gmra.mxu0 %v48
    %v791 = vpop.f32.mrf.mxu0
    %v792 = vadd.f32 %v723, %v791
    %v793 = vpop.f32.mrf.mxu0
    %794 = vmatprep.mubr.f32.mxu0 0.0
    %795 = vmatmul.mubr.f32.gmra.mxu0 %v51
    %v796 = vpop.f32.mrf.mxu0
    %v797 = vadd.f32 %v723, %v796
    %v798 = vpop.f32.mrf.mxu0
    %799 = vdwg.mxu0
    %s800 = scalar_lea.vmem %s3, 32
    %v801 = vld [vmem:[%s800] sm:$0xff]
    %v802 = vld [vmem:[%s800 + $0x8] sm:$0xff]
    %v803 = vld [vmem:[%s800 + $0x10] sm:$0xff]
    %v804 = vld [vmem:[%s800 + $0x18] sm:$0xff]
    %s805 = scalar_lea.vmem %s6, 1
    %v806 = vld [vmem:[%s805] sm:$0x1]
    %v808 = vlaneseq
    %v809 = vshrl.u32 %v808, 7
    %v810 = vsub.s32 0, %v809
    %v811 = vrot.slane %v806, %v810
    %813 = vmatprep.subr.mxu0 0.0
    %814 = vmatpush1.msra.mxu0 0.0
    %815 = vmatprep.subr.mxu0 0.0
    %816 = vmatpush1.msra.mxu0 0.0
    %817 = vmatprep.subr.mxu0 0.0
    %818 = vmatpush1.msra.mxu0 0.0
    %819 = vmatprep.subr.mxu0 0.0
    %820 = vmatpush1.msra.mxu0 0.0
    %821 = vmatprep.subr.mxu0 0.0
    %822 = vmatpush1.msra.mxu0 0.0
    %823 = vmatprep.subr.mxu0 0.0
    %824 = vmatpush1.msra.mxu0 0.0
    %825 = vmatprep.subr.mxu0 0.0
    %826 = vmatpush1.msra.mxu0 0.0
    %827 = vmatprep.subr.mxu0 0.0
    %828 = vmatpush1.msra.mxu0 0.0
    %829 = vmatprep.subr.mxu0 0.0
    %830 = vmatpush1.msra.mxu0 0.0
    %831 = vmatprep.subr.mxu0 0.0
    %832 = vmatpush1.msra.mxu0 0.0
    %833 = vmatprep.subr.mxu0 0.0
    %834 = vmatpush1.msra.mxu0 0.0
    %835 = vmatprep.subr.mxu0 0.0
    %836 = vmatpush1.msra.mxu0 0.0
    %837 = vmatprep.subr.mxu0 0.0
    %838 = vmatpush1.msra.mxu0 %v804
    %839 = vmatprep.subr.mxu0 0.0
    %840 = vmatpush1.msra.mxu0 %v803
    %841 = vmatprep.subr.mxu0 0.0
    %842 = vmatpush1.msra.mxu0 %v802
    %843 = vmatprep.subr.mxu0 0.0
    %844 = vmatpush1.msra.mxu0 %v801
    %845 = vmatprep.subr.mxu0 0.0
    %846 = vmatpush2.msra.mxu0 0.0
    %847 = vmatprep.subr.mxu0 0.0
    %848 = vmatpush2.msra.mxu0 0.0
    %849 = vmatprep.subr.mxu0 0.0
    %850 = vmatpush2.msra.mxu0 0.0
    %851 = vmatprep.subr.mxu0 0.0
    %852 = vmatpush2.msra.mxu0 0.0
    %853 = vmatprep.subr.mxu0 0.0
    %854 = vmatpush2.msra.mxu0 0.0
    %855 = vmatprep.subr.mxu0 0.0
    %856 = vmatpush2.msra.mxu0 0.0
    %857 = vmatprep.subr.mxu0 0.0
    %858 = vmatpush2.msra.mxu0 0.0
    %859 = vmatprep.subr.mxu0 0.0
    %860 = vmatpush2.msra.mxu0 0.0
    %861 = vmatprep.subr.mxu0 0.0
    %862 = vmatpush2.msra.mxu0 0.0
    %863 = vmatprep.subr.mxu0 0.0
    %864 = vmatpush2.msra.mxu0 0.0
    %865 = vmatprep.subr.mxu0 0.0
    %866 = vmatpush2.msra.mxu0 0.0
    %867 = vmatprep.subr.mxu0 0.0
    %868 = vmatpush2.msra.mxu0 0.0
    %869 = vmatprep.subr.mxu0 0.0
    %870 = vmatpush2.msra.mxu0 0.0
    %871 = vmatprep.subr.mxu0 0.0
    %872 = vmatpush2.msra.mxu0 0.0
    %873 = vmatprep.subr.mxu0 0.0
    %874 = vmatpush2.msra.mxu0 0.0
    %875 = vmatprep.subr.mxu0 0.0
    %876 = vmatpush2.msra.mxu0 0.0
    %877 = vmatprep.mubr.f32.mxu0 0.0
    %878 = vmatmul.mubr.f32.gmra.mxu0 %v48
    %v879 = vpop.f32.mrf.mxu0
    %v880 = vadd.f32 %v811, %v879
    %v881 = vpop.f32.mrf.mxu0
    %882 = vmatprep.mubr.f32.mxu0 0.0
    %883 = vmatmul.mubr.f32.gmra.mxu0 %v51
    %v884 = vpop.f32.mrf.mxu0
    %v885 = vadd.f32 %v811, %v884
    %v886 = vpop.f32.mrf.mxu0
    %887 = vdwg.mxu0
    %v888 = vmul.f32 %v704, 0.35355338
    %v889 = vmul.f32 %v709, 0.35355338
    %v891 = vsel %vm302, %v888, 0
    %v894 = vsel %vm302, %v792, 0
    %896 = vmatprep.subr.mxu0 0.0
    %897 = vmatpush1.xpose.msra.mxu0 0.0
    %898 = vmatprep.subr.mxu0 0.0
    %899 = vmatpush1.xpose.msra.mxu0 0.0
    %900 = vmatprep.subr.mxu0 0.0
    %901 = vmatpush1.xpose.msra.mxu0 0.0
    %902 = vmatprep.subr.mxu0 0.0
    %903 = vmatpush1.xpose.msra.mxu0 0.0
    %904 = vmatprep.subr.mxu0 0.0
    %905 = vmatpush1.xpose.msra.mxu0 0.0
    %906 = vmatprep.subr.mxu0 0.0
    %907 = vmatpush1.xpose.msra.mxu0 0.0
    %908 = vmatprep.subr.mxu0 0.0
    %909 = vmatpush1.xpose.msra.mxu0 0.0
    %910 = vmatprep.subr.mxu0 0.0
    %911 = vmatpush1.xpose.msra.mxu0 0.0
    %912 = vmatprep.subr.mxu0 0.0
    %913 = vmatpush1.xpose.msra.mxu0 0.0
    %914 = vmatprep.subr.mxu0 0.0
    %915 = vmatpush1.xpose.msra.mxu0 0.0
    %916 = vmatprep.subr.mxu0 0.0
    %917 = vmatpush1.xpose.msra.mxu0 0.0
    %918 = vmatprep.subr.mxu0 0.0
    %919 = vmatpush1.xpose.msra.mxu0 0.0
    %920 = vmatprep.subr.mxu0 0.0
    %921 = vmatpush1.xpose.msra.mxu0 0.0
    %922 = vmatprep.subr.mxu0 0.0
    %923 = vmatpush1.xpose.msra.mxu0 0.0
    %924 = vmatprep.subr.mxu0 0.0
    %925 = vmatpush1.xpose.msra.mxu0 0.0
    %926 = vmatprep.subr.mxu0 0.0
    %927 = vmatpush1.xpose.msra.mxu0 %v894
    %928 = vmatprep.subr.mxu0 0.0
    %929 = vmatpush2.xpose.msra.mxu0 0.0
    %930 = vmatprep.subr.mxu0 0.0
    %931 = vmatpush2.xpose.msra.mxu0 0.0
    %932 = vmatprep.subr.mxu0 0.0
    %933 = vmatpush2.xpose.msra.mxu0 0.0
    %934 = vmatprep.subr.mxu0 0.0
    %935 = vmatpush2.xpose.msra.mxu0 0.0
    %936 = vmatprep.subr.mxu0 0.0
    %937 = vmatpush2.xpose.msra.mxu0 0.0
    %938 = vmatprep.subr.mxu0 0.0
    %939 = vmatpush2.xpose.msra.mxu0 0.0
    %940 = vmatprep.subr.mxu0 0.0
    %941 = vmatpush2.xpose.msra.mxu0 0.0
    %942 = vmatprep.subr.mxu0 0.0
    %943 = vmatpush2.xpose.msra.mxu0 0.0
    %944 = vmatprep.subr.mxu0 0.0
    %945 = vmatpush2.xpose.msra.mxu0 0.0
    %946 = vmatprep.subr.mxu0 0.0
    %947 = vmatpush2.xpose.msra.mxu0 0.0
    %948 = vmatprep.subr.mxu0 0.0
    %949 = vmatpush2.xpose.msra.mxu0 0.0
    %950 = vmatprep.subr.mxu0 0.0
    %951 = vmatpush2.xpose.msra.mxu0 0.0
    %952 = vmatprep.subr.mxu0 0.0
    %953 = vmatpush2.xpose.msra.mxu0 0.0
    %954 = vmatprep.subr.mxu0 0.0
    %955 = vmatpush2.xpose.msra.mxu0 0.0
    %956 = vmatprep.subr.mxu0 0.0
    %957 = vmatpush2.xpose.msra.mxu0 0.0
    %958 = vmatprep.subr.mxu0 0.0
    %959 = vmatpush2.xpose.msra.mxu0 0.0
    %960 = vmatprep.mubr.f32.mxu0 0.0
    %961 = vmatmul.mubr.f32.gmra.mxu0 %v891
    %v962 = vpop.f32.mrf.mxu0
    %v963 = vadd.f32 0.0, %v962
    %v964 = vpop.f32.mrf.mxu0
    %965 = vdwg.mxu0
    %v967 = vsel %vm302, %v889, 0
    %v970 = vsel %vm302, %v797, 0
    %972 = vmatprep.subr.mxu0 0.0
    %973 = vmatpush1.xpose.msra.mxu0 0.0
    %974 = vmatprep.subr.mxu0 0.0
    %975 = vmatpush1.xpose.msra.mxu0 0.0
    %976 = vmatprep.subr.mxu0 0.0
    %977 = vmatpush1.xpose.msra.mxu0 0.0
    %978 = vmatprep.subr.mxu0 0.0
    %979 = vmatpush1.xpose.msra.mxu0 0.0
    %980 = vmatprep.subr.mxu0 0.0
    %981 = vmatpush1.xpose.msra.mxu0 0.0
    %982 = vmatprep.subr.mxu0 0.0
    %983 = vmatpush1.xpose.msra.mxu0 0.0
    %984 = vmatprep.subr.mxu0 0.0
    %985 = vmatpush1.xpose.msra.mxu0 0.0
    %986 = vmatprep.subr.mxu0 0.0
    %987 = vmatpush1.xpose.msra.mxu0 0.0
    %988 = vmatprep.subr.mxu0 0.0
    %989 = vmatpush1.xpose.msra.mxu0 0.0
    %990 = vmatprep.subr.mxu0 0.0
    %991 = vmatpush1.xpose.msra.mxu0 0.0
    %992 = vmatprep.subr.mxu0 0.0
    %993 = vmatpush1.xpose.msra.mxu0 0.0
    %994 = vmatprep.subr.mxu0 0.0
    %995 = vmatpush1.xpose.msra.mxu0 0.0
    %996 = vmatprep.subr.mxu0 0.0
    %997 = vmatpush1.xpose.msra.mxu0 0.0
    %998 = vmatprep.subr.mxu0 0.0
    %999 = vmatpush1.xpose.msra.mxu0 0.0
    %1000 = vmatprep.subr.mxu0 0.0
    %1001 = vmatpush1.xpose.msra.mxu0 0.0
    %1002 = vmatprep.subr.mxu0 0.0
    %1003 = vmatpush1.xpose.msra.mxu0 %v970
    %1004 = vmatprep.subr.mxu0 0.0
    %1005 = vmatpush2.xpose.msra.mxu0 0.0
    %1006 = vmatprep.subr.mxu0 0.0
    %1007 = vmatpush2.xpose.msra.mxu0 0.0
    %1008 = vmatprep.subr.mxu0 0.0
    %1009 = vmatpush2.xpose.msra.mxu0 0.0
    %1010 = vmatprep.subr.mxu0 0.0
    %1011 = vmatpush2.xpose.msra.mxu0 0.0
    %1012 = vmatprep.subr.mxu0 0.0
    %1013 = vmatpush2.xpose.msra.mxu0 0.0
    %1014 = vmatprep.subr.mxu0 0.0
    %1015 = vmatpush2.xpose.msra.mxu0 0.0
    %1016 = vmatprep.subr.mxu0 0.0
    %1017 = vmatpush2.xpose.msra.mxu0 0.0
    %1018 = vmatprep.subr.mxu0 0.0
    %1019 = vmatpush2.xpose.msra.mxu0 0.0
    %1020 = vmatprep.subr.mxu0 0.0
    %1021 = vmatpush2.xpose.msra.mxu0 0.0
    %1022 = vmatprep.subr.mxu0 0.0
    %1023 = vmatpush2.xpose.msra.mxu0 0.0
    %1024 = vmatprep.subr.mxu0 0.0
    %1025 = vmatpush2.xpose.msra.mxu0 0.0
    %1026 = vmatprep.subr.mxu0 0.0
    %1027 = vmatpush2.xpose.msra.mxu0 0.0
    %1028 = vmatprep.subr.mxu0 0.0
    %1029 = vmatpush2.xpose.msra.mxu0 0.0
    %1030 = vmatprep.subr.mxu0 0.0
    %1031 = vmatpush2.xpose.msra.mxu0 0.0
    %1032 = vmatprep.subr.mxu0 0.0
    %1033 = vmatpush2.xpose.msra.mxu0 0.0
    %1034 = vmatprep.subr.mxu0 0.0
    %1035 = vmatpush2.xpose.msra.mxu0 0.0
    %1036 = vmatprep.mubr.f32.mxu0 0.0
    %1037 = vmatmul.mubr.f32.gmra.mxu0 %v967
    %v1038 = vpop.f32.mrf.mxu0
    %v1039 = vadd.f32 0.0, %v1038
    %v1040 = vpop.f32.mrf.mxu0
    %1041 = vdwg.mxu0
    %v1042 = vsel %vm302, %v963, -inf
    %1043 = vmax.xlane.f32.xlu0 %v1042
    %v1044 = vpop.xlane.xlu0 %1043
    %v1045 = vsel %vm302, %v1039, -inf
    %1046 = vmax.xlane.f32.xlu0 %v1045
    %v1047 = vpop.xlane.xlu0 %1046
    %v1048 = vsub.f32 %v963, %v1044
    %v1049 = vsub.f32 %v1039, %v1047
    %v1050 = vmul.f32 %v1048, 1.442695
    %v1051 = vpow.pop %v1050
    %v1052 = vmul.f32 %v1049, 1.442695
    %v1053 = vpow.pop %v1052
    %v1054 = vsel %vm302, %v1051, 0.0
    %1055 = vadd.xlane.f32.xlu0 %v1054
    %v1056 = vpop.xlane.xlu0 %1055
    %v1057 = vsel %vm302, %v1053, 0.0
    %1058 = vadd.xlane.f32.xlu0 %v1057
    %v1059 = vpop.xlane.xlu0 %1058
    %v1060 = vrcp.pop %v1056
    %v1061 = vrcp.pop %v1059
    %v1062 = vmul.f32 %v1051, %v1060
    %v1063 = vmul.f32 %v1053, %v1061
    %v1065 = vsel %vm302, %v1062, 0
    %1067 = vmatprep.subr.mxu0 0.0
    %1068 = vmatpush1.msra.mxu0 0.0
    %1069 = vmatprep.subr.mxu0 0.0
    %1070 = vmatpush1.msra.mxu0 0.0
    %1071 = vmatprep.subr.mxu0 0.0
    %1072 = vmatpush1.msra.mxu0 0.0
    %1073 = vmatprep.subr.mxu0 0.0
    %1074 = vmatpush1.msra.mxu0 0.0
    %1075 = vmatprep.subr.mxu0 0.0
    %1076 = vmatpush1.msra.mxu0 0.0
    %1077 = vmatprep.subr.mxu0 0.0
    %1078 = vmatpush1.msra.mxu0 0.0
    %1079 = vmatprep.subr.mxu0 0.0
    %1080 = vmatpush1.msra.mxu0 0.0
    %1081 = vmatprep.subr.mxu0 0.0
    %1082 = vmatpush1.msra.mxu0 0.0
    %1083 = vmatprep.subr.mxu0 0.0
    %1084 = vmatpush1.msra.mxu0 0.0
    %1085 = vmatprep.subr.mxu0 0.0
    %1086 = vmatpush1.msra.mxu0 0.0
    %1087 = vmatprep.subr.mxu0 0.0
    %1088 = vmatpush1.msra.mxu0 0.0
    %1089 = vmatprep.subr.mxu0 0.0
    %1090 = vmatpush1.msra.mxu0 0.0
    %1091 = vmatprep.subr.mxu0 0.0
    %1092 = vmatpush1.msra.mxu0 0.0
    %1093 = vmatprep.subr.mxu0 0.0
    %1094 = vmatpush1.msra.mxu0 0.0
    %1095 = vmatprep.subr.mxu0 0.0
    %1096 = vmatpush1.msra.mxu0 0.0
    %1097 = vmatprep.subr.mxu0 0.0
    %1098 = vmatpush1.msra.mxu0 %v880
    %1099 = vmatprep.subr.mxu0 0.0
    %1100 = vmatpush2.msra.mxu0 0.0
    %1101 = vmatprep.subr.mxu0 0.0
    %1102 = vmatpush2.msra.mxu0 0.0
    %1103 = vmatprep.subr.mxu0 0.0
    %1104 = vmatpush2.msra.mxu0 0.0
    %1105 = vmatprep.subr.mxu0 0.0
    %1106 = vmatpush2.msra.mxu0 0.0
    %1107 = vmatprep.subr.mxu0 0.0
    %1108 = vmatpush2.msra.mxu0 0.0
    %1109 = vmatprep.subr.mxu0 0.0
    %1110 = vmatpush2.msra.mxu0 0.0
    %1111 = vmatprep.subr.mxu0 0.0
    %1112 = vmatpush2.msra.mxu0 0.0
    %1113 = vmatprep.subr.mxu0 0.0
    %1114 = vmatpush2.msra.mxu0 0.0
    %1115 = vmatprep.subr.mxu0 0.0
    %1116 = vmatpush2.msra.mxu0 0.0
    %1117 = vmatprep.subr.mxu0 0.0
    %1118 = vmatpush2.msra.mxu0 0.0
    %1119 = vmatprep.subr.mxu0 0.0
    %1120 = vmatpush2.msra.mxu0 0.0
    %1121 = vmatprep.subr.mxu0 0.0
    %1122 = vmatpush2.msra.mxu0 0.0
    %1123 = vmatprep.subr.mxu0 0.0
    %1124 = vmatpush2.msra.mxu0 0.0
    %1125 = vmatprep.subr.mxu0 0.0
    %1126 = vmatpush2.msra.mxu0 0.0
    %1127 = vmatprep.subr.mxu0 0.0
    %1128 = vmatpush2.msra.mxu0 0.0
    %1129 = vmatprep.subr.mxu0 0.0
    %1130 = vmatpush2.msra.mxu0 0.0
    %1131 = vmatprep.mubr.f32.mxu0 0.0
    %1132 = vmatmul.mubr.f32.gmra.mxu0 %v1065
    %v1133 = vpop.f32.mrf.mxu0
    %v1134 = vadd.f32 0.0, %v1133
    %v1135 = vpop.f32.mrf.mxu0
    %1136 = vdwg.mxu0
    %v1138 = vsel %vm302, %v1063, 0
    %1140 = vmatprep.subr.mxu0 0.0
    %1141 = vmatpush1.msra.mxu0 0.0
    %1142 = vmatprep.subr.mxu0 0.0
    %1143 = vmatpush1.msra.mxu0 0.0
    %1144 = vmatprep.subr.mxu0 0.0
    %1145 = vmatpush1.msra.mxu0 0.0
    %1146 = vmatprep.subr.mxu0 0.0
    %1147 = vmatpush1.msra.mxu0 0.0
    %1148 = vmatprep.subr.mxu0 0.0
    %1149 = vmatpush1.msra.mxu0 0.0
    %1150 = vmatprep.subr.mxu0 0.0
    %1151 = vmatpush1.msra.mxu0 0.0
    %1152 = vmatprep.subr.mxu0 0.0
    %1153 = vmatpush1.msra.mxu0 0.0
    %1154 = vmatprep.subr.mxu0 0.0
    %1155 = vmatpush1.msra.mxu0 0.0
    %1156 = vmatprep.subr.mxu0 0.0
    %1157 = vmatpush1.msra.mxu0 0.0
    %1158 = vmatprep.subr.mxu0 0.0
    %1159 = vmatpush1.msra.mxu0 0.0
    %1160 = vmatprep.subr.mxu0 0.0
    %1161 = vmatpush1.msra.mxu0 0.0
    %1162 = vmatprep.subr.mxu0 0.0
    %1163 = vmatpush1.msra.mxu0 0.0
    %1164 = vmatprep.subr.mxu0 0.0
    %1165 = vmatpush1.msra.mxu0 0.0
    %1166 = vmatprep.subr.mxu0 0.0
    %1167 = vmatpush1.msra.mxu0 0.0
    %1168 = vmatprep.subr.mxu0 0.0
    %1169 = vmatpush1.msra.mxu0 0.0
    %1170 = vmatprep.subr.mxu0 0.0
    %1171 = vmatpush1.msra.mxu0 %v885
    %1172 = vmatprep.subr.mxu0 0.0
    %1173 = vmatpush2.msra.mxu0 0.0
    %1174 = vmatprep.subr.mxu0 0.0
    %1175 = vmatpush2.msra.mxu0 0.0
    %1176 = vmatprep.subr.mxu0 0.0
    %1177 = vmatpush2.msra.mxu0 0.0
    %1178 = vmatprep.subr.mxu0 0.0
    %1179 = vmatpush2.msra.mxu0 0.0
    %1180 = vmatprep.subr.mxu0 0.0
    %1181 = vmatpush2.msra.mxu0 0.0
    %1182 = vmatprep.subr.mxu0 0.0
    %1183 = vmatpush2.msra.mxu0 0.0
    %1184 = vmatprep.subr.mxu0 0.0
    %1185 = vmatpush2.msra.mxu0 0.0
    %1186 = vmatprep.subr.mxu0 0.0
    %1187 = vmatpush2.msra.mxu0 0.0
    %1188 = vmatprep.subr.mxu0 0.0
    %1189 = vmatpush2.msra.mxu0 0.0
    %1190 = vmatprep.subr.mxu0 0.0
    %1191 = vmatpush2.msra.mxu0 0.0
    %1192 = vmatprep.subr.mxu0 0.0
    %1193 = vmatpush2.msra.mxu0 0.0
    %1194 = vmatprep.subr.mxu0 0.0
    %1195 = vmatpush2.msra.mxu0 0.0
    %1196 = vmatprep.subr.mxu0 0.0
    %1197 = vmatpush2.msra.mxu0 0.0
    %1198 = vmatprep.subr.mxu0 0.0
    %1199 = vmatpush2.msra.mxu0 0.0
    %1200 = vmatprep.subr.mxu0 0.0
    %1201 = vmatpush2.msra.mxu0 0.0
    %1202 = vmatprep.subr.mxu0 0.0
    %1203 = vmatpush2.msra.mxu0 0.0
    %1204 = vmatprep.mubr.f32.mxu0 0.0
    %1205 = vmatmul.mubr.f32.gmra.mxu0 %v1138
    %v1206 = vpop.f32.mrf.mxu0
    %v1207 = vadd.f32 0.0, %v1206
    %v1208 = vpop.f32.mrf.mxu0
    %1209 = vdwg.mxu0
    %s1210 = scalar_lea.vmem %s7, 8
    %v1211 = vld [vmem:[%s1210] sm:$0xff]
    %v1213 = vsel %vm302, %v1134, 0
    %v1216 = vsel %vm302, %v1207, 0
    %1218 = vmatprep.subr.mxu0 0.0
    %1219 = vmatpush1.msra.mxu0 0.0
    %1220 = vmatprep.subr.mxu0 0.0
    %1221 = vmatpush1.msra.mxu0 0.0
    %1222 = vmatprep.subr.mxu0 0.0
    %1223 = vmatpush1.msra.mxu0 0.0
    %1224 = vmatprep.subr.mxu0 0.0
    %1225 = vmatpush1.msra.mxu0 0.0
    %1226 = vmatprep.subr.mxu0 0.0
    %1227 = vmatpush1.msra.mxu0 0.0
    %1228 = vmatprep.subr.mxu0 0.0
    %1229 = vmatpush1.msra.mxu0 0.0
    %1230 = vmatprep.subr.mxu0 0.0
    %1231 = vmatpush1.msra.mxu0 0.0
    %1232 = vmatprep.subr.mxu0 0.0
    %1233 = vmatpush1.msra.mxu0 0.0
    %1234 = vmatprep.subr.mxu0 0.0
    %1235 = vmatpush1.msra.mxu0 0.0
    %1236 = vmatprep.subr.mxu0 0.0
    %1237 = vmatpush1.msra.mxu0 0.0
    %1238 = vmatprep.subr.mxu0 0.0
    %1239 = vmatpush1.msra.mxu0 0.0
    %1240 = vmatprep.subr.mxu0 0.0
    %1241 = vmatpush1.msra.mxu0 0.0
    %1242 = vmatprep.subr.mxu0 0.0
    %1243 = vmatpush1.msra.mxu0 0.0
    %1244 = vmatprep.subr.mxu0 0.0
    %1245 = vmatpush1.msra.mxu0 0.0
    %1246 = vmatprep.subr.mxu0 0.0
    %1247 = vmatpush1.msra.mxu0 0.0
    %1248 = vmatprep.subr.mxu0 0.0
    %1249 = vmatpush1.msra.mxu0 %v1211
    %1250 = vmatprep.subr.mxu0 0.0
    %1251 = vmatpush2.msra.mxu0 0.0
    %1252 = vmatprep.subr.mxu0 0.0
    %1253 = vmatpush2.msra.mxu0 0.0
    %1254 = vmatprep.subr.mxu0 0.0
    %1255 = vmatpush2.msra.mxu0 0.0
    %1256 = vmatprep.subr.mxu0 0.0
    %1257 = vmatpush2.msra.mxu0 0.0
    %1258 = vmatprep.subr.mxu0 0.0
    %1259 = vmatpush2.msra.mxu0 0.0
    %1260 = vmatprep.subr.mxu0 0.0
    %1261 = vmatpush2.msra.mxu0 0.0
    %1262 = vmatprep.subr.mxu0 0.0
    %1263 = vmatpush2.msra.mxu0 0.0
    %1264 = vmatprep.subr.mxu0 0.0
    %1265 = vmatpush2.msra.mxu0 0.0
    %1266 = vmatprep.subr.mxu0 0.0
    %1267 = vmatpush2.msra.mxu0 0.0
    %1268 = vmatprep.subr.mxu0 0.0
    %1269 = vmatpush2.msra.mxu0 0.0
    %1270 = vmatprep.subr.mxu0 0.0
    %1271 = vmatpush2.msra.mxu0 0.0
    %1272 = vmatprep.subr.mxu0 0.0
    %1273 = vmatpush2.msra.mxu0 0.0
    %1274 = vmatprep.subr.mxu0 0.0
    %1275 = vmatpush2.msra.mxu0 0.0
    %1276 = vmatprep.subr.mxu0 0.0
    %1277 = vmatpush2.msra.mxu0 0.0
    %1278 = vmatprep.subr.mxu0 0.0
    %1279 = vmatpush2.msra.mxu0 0.0
    %1280 = vmatprep.subr.mxu0 0.0
    %1281 = vmatpush2.msra.mxu0 0.0
    %1282 = vmatprep.mubr.f32.mxu0 0.0
    %1283 = vmatmul.mubr.f32.gmra.mxu0 %v1213
    %v1284 = vpop.f32.mrf.mxu0
    %v1285 = vadd.f32 0.0, %v1284
    %v1286 = vpop.f32.mrf.mxu0
    %1287 = vmatprep.mubr.f32.mxu0 0.0
    %1288 = vmatmul.mubr.f32.gmra.mxu0 %v1216
    %v1289 = vpop.f32.mrf.mxu0
    %v1290 = vadd.f32 0.0, %v1289
    %v1291 = vpop.f32.mrf.mxu0
    %1292 = vdwg.mxu0
    %v1294 = vsel %vm302, %v547, 0
    %v1297 = vsel %vm302, %v620, 0
    %1299 = vmatprep.subr.mxu0 0.0
    %1300 = vmatpush1.msra.mxu0 0.0
    %1301 = vmatprep.subr.mxu0 0.0
    %1302 = vmatpush1.msra.mxu0 0.0
    %1303 = vmatprep.subr.mxu0 0.0
    %1304 = vmatpush1.msra.mxu0 0.0
    %1305 = vmatprep.subr.mxu0 0.0
    %1306 = vmatpush1.msra.mxu0 0.0
    %1307 = vmatprep.subr.mxu0 0.0
    %1308 = vmatpush1.msra.mxu0 0.0
    %1309 = vmatprep.subr.mxu0 0.0
    %1310 = vmatpush1.msra.mxu0 0.0
    %1311 = vmatprep.subr.mxu0 0.0
    %1312 = vmatpush1.msra.mxu0 0.0
    %1313 = vmatprep.subr.mxu0 0.0
    %1314 = vmatpush1.msra.mxu0 0.0
    %1315 = vmatprep.subr.mxu0 0.0
    %1316 = vmatpush1.msra.mxu0 0.0
    %1317 = vmatprep.subr.mxu0 0.0
    %1318 = vmatpush1.msra.mxu0 0.0
    %1319 = vmatprep.subr.mxu0 0.0
    %1320 = vmatpush1.msra.mxu0 0.0
    %1321 = vmatprep.subr.mxu0 0.0
    %1322 = vmatpush1.msra.mxu0 0.0
    %1323 = vmatprep.subr.mxu0 0.0
    %1324 = vmatpush1.msra.mxu0 0.0
    %1325 = vmatprep.subr.mxu0 0.0
    %1326 = vmatpush1.msra.mxu0 0.0
    %1327 = vmatprep.subr.mxu0 0.0
    %1328 = vmatpush1.msra.mxu0 0.0
    %1329 = vmatprep.subr.mxu0 0.0
    %1330 = vmatpush1.msra.mxu0 %v623
    %1331 = vmatprep.subr.mxu0 0.0
    %1332 = vmatpush2.msra.mxu0 0.0
    %1333 = vmatprep.subr.mxu0 0.0
    %1334 = vmatpush2.msra.mxu0 0.0
    %1335 = vmatprep.subr.mxu0 0.0
    %1336 = vmatpush2.msra.mxu0 0.0
    %1337 = vmatprep.subr.mxu0 0.0
    %1338 = vmatpush2.msra.mxu0 0.0
    %1339 = vmatprep.subr.mxu0 0.0
    %1340 = vmatpush2.msra.mxu0 0.0
    %1341 = vmatprep.subr.mxu0 0.0
    %1342 = vmatpush2.msra.mxu0 0.0
    %1343 = vmatprep.subr.mxu0 0.0
    %1344 = vmatpush2.msra.mxu0 0.0
    %1345 = vmatprep.subr.mxu0 0.0
    %1346 = vmatpush2.msra.mxu0 0.0
    %1347 = vmatprep.subr.mxu0 0.0
    %1348 = vmatpush2.msra.mxu0 0.0
    %1349 = vmatprep.subr.mxu0 0.0
    %1350 = vmatpush2.msra.mxu0 0.0
    %1351 = vmatprep.subr.mxu0 0.0
    %1352 = vmatpush2.msra.mxu0 0.0
    %1353 = vmatprep.subr.mxu0 0.0
    %1354 = vmatpush2.msra.mxu0 0.0
    %1355 = vmatprep.subr.mxu0 0.0
    %1356 = vmatpush2.msra.mxu0 0.0
    %1357 = vmatprep.subr.mxu0 0.0
    %1358 = vmatpush2.msra.mxu0 0.0
    %1359 = vmatprep.subr.mxu0 0.0
    %1360 = vmatpush2.msra.mxu0 0.0
    %1361 = vmatprep.subr.mxu0 0.0
    %1362 = vmatpush2.msra.mxu0 0.0
    %1363 = vmatprep.mubr.f32.mxu0 0.0
    %1364 = vmatmul.mubr.f32.gmra.mxu0 %v1294
    %v1365 = vpop.f32.mrf.mxu0
    %v1366 = vadd.f32 %v1285, %v1365
    %v1367 = vpop.f32.mrf.mxu0
    %1368 = vmatprep.mubr.f32.mxu0 0.0
    %1369 = vmatmul.mubr.f32.gmra.mxu0 %v1297
    %v1370 = vpop.f32.mrf.mxu0
    %v1371 = vadd.f32 %v1290, %v1370
    %v1372 = vpop.f32.mrf.mxu0
    %1373 = vdwg.mxu0
    %s1374 = scalar_lea.vmem %s1, 64
    %v1375 = vld [vmem:[%s1374] sm:$0xff]
    %v1376 = vld [vmem:[%s1374 + $0x8] sm:$0xff]
    %v1377 = vld [vmem:[%s1374 + $0x10] sm:$0xff]
    %v1378 = vld [vmem:[%s1374 + $0x18] sm:$0xff]
    %s1379 = scalar_lea.vmem %s4, 2
    %v1380 = vld [vmem:[%s1379] sm:$0x1]
    %v1382 = vlaneseq
    %v1383 = vshrl.u32 %v1382, 7
    %v1384 = vsub.s32 0, %v1383
    %v1385 = vrot.slane %v1380, %v1384
    %1387 = vmatprep.subr.mxu0 0.0
    %1388 = vmatpush1.msra.mxu0 0.0
    %1389 = vmatprep.subr.mxu0 0.0
    %1390 = vmatpush1.msra.mxu0 0.0
    %1391 = vmatprep.subr.mxu0 0.0
    %1392 = vmatpush1.msra.mxu0 0.0
    %1393 = vmatprep.subr.mxu0 0.0
    %1394 = vmatpush1.msra.mxu0 0.0
    %1395 = vmatprep.subr.mxu0 0.0
    %1396 = vmatpush1.msra.mxu0 0.0
    %1397 = vmatprep.subr.mxu0 0.0
    %1398 = vmatpush1.msra.mxu0 0.0
    %1399 = vmatprep.subr.mxu0 0.0
    %1400 = vmatpush1.msra.mxu0 0.0
    %1401 = vmatprep.subr.mxu0 0.0
    %1402 = vmatpush1.msra.mxu0 0.0
    %1403 = vmatprep.subr.mxu0 0.0
    %1404 = vmatpush1.msra.mxu0 0.0
    %1405 = vmatprep.subr.mxu0 0.0
    %1406 = vmatpush1.msra.mxu0 0.0
    %1407 = vmatprep.subr.mxu0 0.0
    %1408 = vmatpush1.msra.mxu0 0.0
    %1409 = vmatprep.subr.mxu0 0.0
    %1410 = vmatpush1.msra.mxu0 0.0
    %1411 = vmatprep.subr.mxu0 0.0
    %1412 = vmatpush1.msra.mxu0 %v1378
    %1413 = vmatprep.subr.mxu0 0.0
    %1414 = vmatpush1.msra.mxu0 %v1377
    %1415 = vmatprep.subr.mxu0 0.0
    %1416 = vmatpush1.msra.mxu0 %v1376
    %1417 = vmatprep.subr.mxu0 0.0
    %1418 = vmatpush1.msra.mxu0 %v1375
    %1419 = vmatprep.subr.mxu0 0.0
    %1420 = vmatpush2.msra.mxu0 0.0
    %1421 = vmatprep.subr.mxu0 0.0
    %1422 = vmatpush2.msra.mxu0 0.0
    %1423 = vmatprep.subr.mxu0 0.0
    %1424 = vmatpush2.msra.mxu0 0.0
    %1425 = vmatprep.subr.mxu0 0.0
    %1426 = vmatpush2.msra.mxu0 0.0
    %1427 = vmatprep.subr.mxu0 0.0
    %1428 = vmatpush2.msra.mxu0 0.0
    %1429 = vmatprep.subr.mxu0 0.0
    %1430 = vmatpush2.msra.mxu0 0.0
    %1431 = vmatprep.subr.mxu0 0.0
    %1432 = vmatpush2.msra.mxu0 0.0
    %1433 = vmatprep.subr.mxu0 0.0
    %1434 = vmatpush2.msra.mxu0 0.0
    %1435 = vmatprep.subr.mxu0 0.0
    %1436 = vmatpush2.msra.mxu0 0.0
    %1437 = vmatprep.subr.mxu0 0.0
    %1438 = vmatpush2.msra.mxu0 0.0
    %1439 = vmatprep.subr.mxu0 0.0
    %1440 = vmatpush2.msra.mxu0 0.0
    %1441 = vmatprep.subr.mxu0 0.0
    %1442 = vmatpush2.msra.mxu0 0.0
    %1443 = vmatprep.subr.mxu0 0.0
    %1444 = vmatpush2.msra.mxu0 0.0
    %1445 = vmatprep.subr.mxu0 0.0
    %1446 = vmatpush2.msra.mxu0 0.0
    %1447 = vmatprep.subr.mxu0 0.0
    %1448 = vmatpush2.msra.mxu0 0.0
    %1449 = vmatprep.subr.mxu0 0.0
    %1450 = vmatpush2.msra.mxu0 0.0
    %1451 = vmatprep.mubr.f32.mxu0 0.0
    %1452 = vmatmul.mubr.f32.gmra.mxu0 %v48
    %v1453 = vpop.f32.mrf.mxu0
    %v1454 = vadd.f32 %v1385, %v1453
    %v1455 = vpop.f32.mrf.mxu0
    %1456 = vmatprep.mubr.f32.mxu0 0.0
    %1457 = vmatmul.mubr.f32.gmra.mxu0 %v51
    %v1458 = vpop.f32.mrf.mxu0
    %v1459 = vadd.f32 %v1385, %v1458
    %v1460 = vpop.f32.mrf.mxu0
    %1461 = vdwg.mxu0
    %s1462 = scalar_lea.vmem %s2, 64
    %v1463 = vld [vmem:[%s1462] sm:$0xff]
    %v1464 = vld [vmem:[%s1462 + $0x8] sm:$0xff]
    %v1465 = vld [vmem:[%s1462 + $0x10] sm:$0xff]
    %v1466 = vld [vmem:[%s1462 + $0x18] sm:$0xff]
    %s1467 = scalar_lea.vmem %s5, 2
    %v1468 = vld [vmem:[%s1467] sm:$0x1]
    %v1470 = vlaneseq
    %v1471 = vshrl.u32 %v1470, 7
    %v1472 = vsub.s32 0, %v1471
    %v1473 = vrot.slane %v1468, %v1472
    %1475 = vmatprep.subr.mxu0 0.0
    %1476 = vmatpush1.msra.mxu0 0.0
    %1477 = vmatprep.subr.mxu0 0.0
    %1478 = vmatpush1.msra.mxu0 0.0
    %1479 = vmatprep.subr.mxu0 0.0
    %1480 = vmatpush1.msra.mxu0 0.0
    %1481 = vmatprep.subr.mxu0 0.0
    %1482 = vmatpush1.msra.mxu0 0.0
    %1483 = vmatprep.subr.mxu0 0.0
    %1484 = vmatpush1.msra.mxu0 0.0
    %1485 = vmatprep.subr.mxu0 0.0
    %1486 = vmatpush1.msra.mxu0 0.0
    %1487 = vmatprep.subr.mxu0 0.0
    %1488 = vmatpush1.msra.mxu0 0.0
    %1489 = vmatprep.subr.mxu0 0.0
    %1490 = vmatpush1.msra.mxu0 0.0
    %1491 = vmatprep.subr.mxu0 0.0
    %1492 = vmatpush1.msra.mxu0 0.0
    %1493 = vmatprep.subr.mxu0 0.0
    %1494 = vmatpush1.msra.mxu0 0.0
    %1495 = vmatprep.subr.mxu0 0.0
    %1496 = vmatpush1.msra.mxu0 0.0
    %1497 = vmatprep.subr.mxu0 0.0
    %1498 = vmatpush1.msra.mxu0 0.0
    %1499 = vmatprep.subr.mxu0 0.0
    %1500 = vmatpush1.msra.mxu0 %v1466
    %1501 = vmatprep.subr.mxu0 0.0
    %1502 = vmatpush1.msra.mxu0 %v1465
    %1503 = vmatprep.subr.mxu0 0.0
    %1504 = vmatpush1.msra.mxu0 %v1464
    %1505 = vmatprep.subr.mxu0 0.0
    %1506 = vmatpush1.msra.mxu0 %v1463
    %1507 = vmatprep.subr.mxu0 0.0
    %1508 = vmatpush2.msra.mxu0 0.0
    %1509 = vmatprep.subr.mxu0 0.0
    %1510 = vmatpush2.msra.mxu0 0.0
    %1511 = vmatprep.subr.mxu0 0.0
    %1512 = vmatpush2.msra.mxu0 0.0
    %1513 = vmatprep.subr.mxu0 0.0
    %1514 = vmatpush2.msra.mxu0 0.0
    %1515 = vmatprep.subr.mxu0 0.0
    %1516 = vmatpush2.msra.mxu0 0.0
    %1517 = vmatprep.subr.mxu0 0.0
    %1518 = vmatpush2.msra.mxu0 0.0
    %1519 = vmatprep.subr.mxu0 0.0
    %1520 = vmatpush2.msra.mxu0 0.0
    %1521 = vmatprep.subr.mxu0 0.0
    %1522 = vmatpush2.msra.mxu0 0.0
    %1523 = vmatprep.subr.mxu0 0.0
    %1524 = vmatpush2.msra.mxu0 0.0
    %1525 = vmatprep.subr.mxu0 0.0
    %1526 = vmatpush2.msra.mxu0 0.0
    %1527 = vmatprep.subr.mxu0 0.0
    %1528 = vmatpush2.msra.mxu0 0.0
    %1529 = vmatprep.subr.mxu0 0.0
    %1530 = vmatpush2.msra.mxu0 0.0
    %1531 = vmatprep.subr.mxu0 0.0
    %1532 = vmatpush2.msra.mxu0 0.0
    %1533 = vmatprep.subr.mxu0 0.0
    %1534 = vmatpush2.msra.mxu0 0.0
    %1535 = vmatprep.subr.mxu0 0.0
    %1536 = vmatpush2.msra.mxu0 0.0
    %1537 = vmatprep.subr.mxu0 0.0
    %1538 = vmatpush2.msra.mxu0 0.0
    %1539 = vmatprep.mubr.f32.mxu0 0.0
    %1540 = vmatmul.mubr.f32.gmra.mxu0 %v48
    %v1541 = vpop.f32.mrf.mxu0
    %v1542 = vadd.f32 %v1473, %v1541
    %v1543 = vpop.f32.mrf.mxu0
    %1544 = vmatprep.mubr.f32.mxu0 0.0
    %1545 = vmatmul.mubr.f32.gmra.mxu0 %v51
    %v1546 = vpop.f32.mrf.mxu0
    %v1547 = vadd.f32 %v1473, %v1546
    %v1548 = vpop.f32.mrf.mxu0
    %1549 = vdwg.mxu0
    %s1550 = scalar_lea.vmem %s3, 64
    %v1551 = vld [vmem:[%s1550] sm:$0xff]
    %v1552 = vld [vmem:[%s1550 + $0x8] sm:$0xff]
    %v1553 = vld [vmem:[%s1550 + $0x10] sm:$0xff]
    %v1554 = vld [vmem:[%s1550 + $0x18] sm:$0xff]
    %s1555 = scalar_lea.vmem %s6, 2
    %v1556 = vld [vmem:[%s1555] sm:$0x1]
    %v1558 = vlaneseq
    %v1559 = vshrl.u32 %v1558, 7
    %v1560 = vsub.s32 0, %v1559
    %v1561 = vrot.slane %v1556, %v1560
    %1563 = vmatprep.subr.mxu0 0.0
    %1564 = vmatpush1.msra.mxu0 0.0
    %1565 = vmatprep.subr.mxu0 0.0
    %1566 = vmatpush1.msra.mxu0 0.0
    %1567 = vmatprep.subr.mxu0 0.0
    %1568 = vmatpush1.msra.mxu0 0.0
    %1569 = vmatprep.subr.mxu0 0.0
    %1570 = vmatpush1.msra.mxu0 0.0
    %1571 = vmatprep.subr.mxu0 0.0
    %1572 = vmatpush1.msra.mxu0 0.0
    %1573 = vmatprep.subr.mxu0 0.0
    %1574 = vmatpush1.msra.mxu0 0.0
    %1575 = vmatprep.subr.mxu0 0.0
    %1576 = vmatpush1.msra.mxu0 0.0
    %1577 = vmatprep.subr.mxu0 0.0
    %1578 = vmatpush1.msra.mxu0 0.0
    %1579 = vmatprep.subr.mxu0 0.0
    %1580 = vmatpush1.msra.mxu0 0.0
    %1581 = vmatprep.subr.mxu0 0.0
    %1582 = vmatpush1.msra.mxu0 0.0
    %1583 = vmatprep.subr.mxu0 0.0
    %1584 = vmatpush1.msra.mxu0 0.0
    %1585 = vmatprep.subr.mxu0 0.0
    %1586 = vmatpush1.msra.mxu0 0.0
    %1587 = vmatprep.subr.mxu0 0.0
    %1588 = vmatpush1.msra.mxu0 %v1554
    %1589 = vmatprep.subr.mxu0 0.0
    %1590 = vmatpush1.msra.mxu0 %v1553
    %1591 = vmatprep.subr.mxu0 0.0
    %1592 = vmatpush1.msra.mxu0 %v1552
    %1593 = vmatprep.subr.mxu0 0.0
    %1594 = vmatpush1.msra.mxu0 %v1551
    %1595 = vmatprep.subr.mxu0 0.0
    %1596 = vmatpush2.msra.mxu0 0.0
    %1597 = vmatprep.subr.mxu0 0.0
    %1598 = vmatpush2.msra.mxu0 0.0
    %1599 = vmatprep.subr.mxu0 0.0
    %1600 = vmatpush2.msra.mxu0 0.0
    %1601 = vmatprep.subr.mxu0 0.0
    %1602 = vmatpush2.msra.mxu0 0.0
    %1603 = vmatprep.subr.mxu0 0.0
    %1604 = vmatpush2.msra.mxu0 0.0
    %1605 = vmatprep.subr.mxu0 0.0
    %1606 = vmatpush2.msra.mxu0 0.0
    %1607 = vmatprep.subr.mxu0 0.0
    %1608 = vmatpush2.msra.mxu0 0.0
    %1609 = vmatprep.subr.mxu0 0.0
    %1610 = vmatpush2.msra.mxu0 0.0
    %1611 = vmatprep.subr.mxu0 0.0
    %1612 = vmatpush2.msra.mxu0 0.0
    %1613 = vmatprep.subr.mxu0 0.0
    %1614 = vmatpush2.msra.mxu0 0.0
    %1615 = vmatprep.subr.mxu0 0.0
    %1616 = vmatpush2.msra.mxu0 0.0
    %1617 = vmatprep.subr.mxu0 0.0
    %1618 = vmatpush2.msra.mxu0 0.0
    %1619 = vmatprep.subr.mxu0 0.0
    %1620 = vmatpush2.msra.mxu0 0.0
    %1621 = vmatprep.subr.mxu0 0.0
    %1622 = vmatpush2.msra.mxu0 0.0
    %1623 = vmatprep.subr.mxu0 0.0
    %1624 = vmatpush2.msra.mxu0 0.0
    %1625 = vmatprep.subr.mxu0 0.0
    %1626 = vmatpush2.msra.mxu0 0.0
    %1627 = vmatprep.mubr.f32.mxu0 0.0
    %1628 = vmatmul.mubr.f32.gmra.mxu0 %v48
    %v1629 = vpop.f32.mrf.mxu0
    %v1630 = vadd.f32 %v1561, %v1629
    %v1631 = vpop.f32.mrf.mxu0
    %1632 = vmatprep.mubr.f32.mxu0 0.0
    %1633 = vmatmul.mubr.f32.gmra.mxu0 %v51
    %v1634 = vpop.f32.mrf.mxu0
    %v1635 = vadd.f32 %v1561, %v1634
    %v1636 = vpop.f32.mrf.mxu0
    %1637 = vdwg.mxu0
    %v1638 = vmul.f32 %v1454, 0.35355338
    %v1639 = vmul.f32 %v1459, 0.35355338
    %v1641 = vsel %vm302, %v1638, 0
    %v1644 = vsel %vm302, %v1542, 0
    %1646 = vmatprep.subr.mxu0 0.0
    %1647 = vmatpush1.xpose.msra.mxu0 0.0
    %1648 = vmatprep.subr.mxu0 0.0
    %1649 = vmatpush1.xpose.msra.mxu0 0.0
    %1650 = vmatprep.subr.mxu0 0.0
    %1651 = vmatpush1.xpose.msra.mxu0 0.0
    %1652 = vmatprep.subr.mxu0 0.0
    %1653 = vmatpush1.xpose.msra.mxu0 0.0
    %1654 = vmatprep.subr.mxu0 0.0
    %1655 = vmatpush1.xpose.msra.mxu0 0.0
    %1656 = vmatprep.subr.mxu0 0.0
    %1657 = vmatpush1.xpose.msra.mxu0 0.0
    %1658 = vmatprep.subr.mxu0 0.0
    %1659 = vmatpush1.xpose.msra.mxu0 0.0
    %1660 = vmatprep.subr.mxu0 0.0
    %1661 = vmatpush1.xpose.msra.mxu0 0.0
    %1662 = vmatprep.subr.mxu0 0.0
    %1663 = vmatpush1.xpose.msra.mxu0 0.0
    %1664 = vmatprep.subr.mxu0 0.0
    %1665 = vmatpush1.xpose.msra.mxu0 0.0
    %1666 = vmatprep.subr.mxu0 0.0
    %1667 = vmatpush1.xpose.msra.mxu0 0.0
    %1668 = vmatprep.subr.mxu0 0.0
    %1669 = vmatpush1.xpose.msra.mxu0 0.0
    %1670 = vmatprep.subr.mxu0 0.0
    %1671 = vmatpush1.xpose.msra.mxu0 0.0
    %1672 = vmatprep.subr.mxu0 0.0
    %1673 = vmatpush1.xpose.msra.mxu0 0.0
    %1674 = vmatprep.subr.mxu0 0.0
    %1675 = vmatpush1.xpose.msra.mxu0 0.0
    %1676 = vmatprep.subr.mxu0 0.0
    %1677 = vmatpush1.xpose.msra.mxu0 %v1644
    %1678 = vmatprep.subr.mxu0 0.0
    %1679 = vmatpush2.xpose.msra.mxu0 0.0
    %1680 = vmatprep.subr.mxu0 0.0
    %1681 = vmatpush2.xpose.msra.mxu0 0.0
    %1682 = vmatprep.subr.mxu0 0.0
    %1683 = vmatpush2.xpose.msra.mxu0 0.0
    %1684 = vmatprep.subr.mxu0 0.0
    %1685 = vmatpush2.xpose.msra.mxu0 0.0
    %1686 = vmatprep.subr.mxu0 0.0
    %1687 = vmatpush2.xpose.msra.mxu0 0.0
    %1688 = vmatprep.subr.mxu0 0.0
    %1689 = vmatpush2.xpose.msra.mxu0 0.0
    %1690 = vmatprep.subr.mxu0 0.0
    %1691 = vmatpush2.xpose.msra.mxu0 0.0
    %1692 = vmatprep.subr.mxu0 0.0
    %1693 = vmatpush2.xpose.msra.mxu0 0.0
    %1694 = vmatprep.subr.mxu0 0.0
    %1695 = vmatpush2.xpose.msra.mxu0 0.0
    %1696 = vmatprep.subr.mxu0 0.0
    %1697 = vmatpush2.xpose.msra.mxu0 0.0
    %1698 = vmatprep.subr.mxu0 0.0
    %1699 = vmatpush2.xpose.msra.mxu0 0.0
    %1700 = vmatprep.subr.mxu0 0.0
    %1701 = vmatpush2.xpose.msra.mxu0 0.0
    %1702 = vmatprep.subr.mxu0 0.0
    %1703 = vmatpush2.xpose.msra.mxu0 0.0
    %1704 = vmatprep.subr.mxu0 0.0
    %1705 = vmatpush2.xpose.msra.mxu0 0.0
    %1706 = vmatprep.subr.mxu0 0.0
    %1707 = vmatpush2.xpose.msra.mxu0 0.0
    %1708 = vmatprep.subr.mxu0 0.0
    %1709 = vmatpush2.xpose.msra.mxu0 0.0
    %1710 = vmatprep.mubr.f32.mxu0 0.0
    %1711 = vmatmul.mubr.f32.gmra.mxu0 %v1641
    %v1712 = vpop.f32.mrf.mxu0
    %v1713 = vadd.f32 0.0, %v1712
    %v1714 = vpop.f32.mrf.mxu0
    %1715 = vdwg.mxu0
    %v1717 = vsel %vm302, %v1639, 0
    %v1720 = vsel %vm302, %v1547, 0
    %1722 = vmatprep.subr.mxu0 0.0
    %1723 = vmatpush1.xpose.msra.mxu0 0.0
    %1724 = vmatprep.subr.mxu0 0.0
    %1725 = vmatpush1.xpose.msra.mxu0 0.0
    %1726 = vmatprep.subr.mxu0 0.0
    %1727 = vmatpush1.xpose.msra.mxu0 0.0
    %1728 = vmatprep.subr.mxu0 0.0
    %1729 = vmatpush1.xpose.msra.mxu0 0.0
    %1730 = vmatprep.subr.mxu0 0.0
    %1731 = vmatpush1.xpose.msra.mxu0 0.0
    %1732 = vmatprep.subr.mxu0 0.0
    %1733 = vmatpush1.xpose.msra.mxu0 0.0
    %1734 = vmatprep.subr.mxu0 0.0
    %1735 = vmatpush1.xpose.msra.mxu0 0.0
    %1736 = vmatprep.subr.mxu0 0.0
    %1737 = vmatpush1.xpose.msra.mxu0 0.0
    %1738 = vmatprep.subr.mxu0 0.0
    %1739 = vmatpush1.xpose.msra.mxu0 0.0
    %1740 = vmatprep.subr.mxu0 0.0
    %1741 = vmatpush1.xpose.msra.mxu0 0.0
    %1742 = vmatprep.subr.mxu0 0.0
    %1743 = vmatpush1.xpose.msra.mxu0 0.0
    %1744 = vmatprep.subr.mxu0 0.0
    %1745 = vmatpush1.xpose.msra.mxu0 0.0
    %1746 = vmatprep.subr.mxu0 0.0
    %1747 = vmatpush1.xpose.msra.mxu0 0.0
    %1748 = vmatprep.subr.mxu0 0.0
    %1749 = vmatpush1.xpose.msra.mxu0 0.0
    %1750 = vmatprep.subr.mxu0 0.0
    %1751 = vmatpush1.xpose.msra.mxu0 0.0
    %1752 = vmatprep.subr.mxu0 0.0
    %1753 = vmatpush1.xpose.msra.mxu0 %v1720
    %1754 = vmatprep.subr.mxu0 0.0
    %1755 = vmatpush2.xpose.msra.mxu0 0.0
    %1756 = vmatprep.subr.mxu0 0.0
    %1757 = vmatpush2.xpose.msra.mxu0 0.0
    %1758 = vmatprep.subr.mxu0 0.0
    %1759 = vmatpush2.xpose.msra.mxu0 0.0
    %1760 = vmatprep.subr.mxu0 0.0
    %1761 = vmatpush2.xpose.msra.mxu0 0.0
    %1762 = vmatprep.subr.mxu0 0.0
    %1763 = vmatpush2.xpose.msra.mxu0 0.0
    %1764 = vmatprep.subr.mxu0 0.0
    %1765 = vmatpush2.xpose.msra.mxu0 0.0
    %1766 = vmatprep.subr.mxu0 0.0
    %1767 = vmatpush2.xpose.msra.mxu0 0.0
    %1768 = vmatprep.subr.mxu0 0.0
    %1769 = vmatpush2.xpose.msra.mxu0 0.0
    %1770 = vmatprep.subr.mxu0 0.0
    %1771 = vmatpush2.xpose.msra.mxu0 0.0
    %1772 = vmatprep.subr.mxu0 0.0
    %1773 = vmatpush2.xpose.msra.mxu0 0.0
    %1774 = vmatprep.subr.mxu0 0.0
    %1775 = vmatpush2.xpose.msra.mxu0 0.0
    %1776 = vmatprep.subr.mxu0 0.0
    %1777 = vmatpush2.xpose.msra.mxu0 0.0
    %1778 = vmatprep.subr.mxu0 0.0
    %1779 = vmatpush2.xpose.msra.mxu0 0.0
    %1780 = vmatprep.subr.mxu0 0.0
    %1781 = vmatpush2.xpose.msra.mxu0 0.0
    %1782 = vmatprep.subr.mxu0 0.0
    %1783 = vmatpush2.xpose.msra.mxu0 0.0
    %1784 = vmatprep.subr.mxu0 0.0
    %1785 = vmatpush2.xpose.msra.mxu0 0.0
    %1786 = vmatprep.mubr.f32.mxu0 0.0
    %1787 = vmatmul.mubr.f32.gmra.mxu0 %v1717
    %v1788 = vpop.f32.mrf.mxu0
    %v1789 = vadd.f32 0.0, %v1788
    %v1790 = vpop.f32.mrf.mxu0
    %1791 = vdwg.mxu0
    %v1792 = vsel %vm302, %v1713, -inf
    %1793 = vmax.xlane.f32.xlu0 %v1792
    %v1794 = vpop.xlane.xlu0 %1793
    %v1795 = vsel %vm302, %v1789, -inf
    %1796 = vmax.xlane.f32.xlu0 %v1795
    %v1797 = vpop.xlane.xlu0 %1796
    %v1798 = vsub.f32 %v1713, %v1794
    %v1799 = vsub.f32 %v1789, %v1797
    %v1800 = vmul.f32 %v1798, 1.442695
    %v1801 = vpow.pop %v1800
    %v1802 = vmul.f32 %v1799, 1.442695
    %v1803 = vpow.pop %v1802
    %v1804 = vsel %vm302, %v1801, 0.0
    %1805 = vadd.xlane.f32.xlu0 %v1804
    %v1806 = vpop.xlane.xlu0 %1805
    %v1807 = vsel %vm302, %v1803, 0.0
    %1808 = vadd.xlane.f32.xlu0 %v1807
    %v1809 = vpop.xlane.xlu0 %1808
    %v1810 = vrcp.pop %v1806
    %v1811 = vrcp.pop %v1809
    %v1812 = vmul.f32 %v1801, %v1810
    %v1813 = vmul.f32 %v1803, %v1811
    %v1815 = vsel %vm302, %v1812, 0
    %1817 = vmatprep.subr.mxu0 0.0
    %1818 = vmatpush1.msra.mxu0 0.0
    %1819 = vmatprep.subr.mxu0 0.0
    %1820 = vmatpush1.msra.mxu0 0.0
    %1821 = vmatprep.subr.mxu0 0.0
    %1822 = vmatpush1.msra.mxu0 0.0
    %1823 = vmatprep.subr.mxu0 0.0
    %1824 = vmatpush1.msra.mxu0 0.0
    %1825 = vmatprep.subr.mxu0 0.0
    %1826 = vmatpush1.msra.mxu0 0.0
    %1827 = vmatprep.subr.mxu0 0.0
    %1828 = vmatpush1.msra.mxu0 0.0
    %1829 = vmatprep.subr.mxu0 0.0
    %1830 = vmatpush1.msra.mxu0 0.0
    %1831 = vmatprep.subr.mxu0 0.0
    %1832 = vmatpush1.msra.mxu0 0.0
    %1833 = vmatprep.subr.mxu0 0.0
    %1834 = vmatpush1.msra.mxu0 0.0
    %1835 = vmatprep.subr.mxu0 0.0
    %1836 = vmatpush1.msra.mxu0 0.0
    %1837 = vmatprep.subr.mxu0 0.0
    %1838 = vmatpush1.msra.mxu0 0.0
    %1839 = vmatprep.subr.mxu0 0.0
    %1840 = vmatpush1.msra.mxu0 0.0
    %1841 = vmatprep.subr.mxu0 0.0
    %1842 = vmatpush1.msra.mxu0 0.0
    %1843 = vmatprep.subr.mxu0 0.0
    %1844 = vmatpush1.msra.mxu0 0.0
    %1845 = vmatprep.subr.mxu0 0.0
    %1846 = vmatpush1.msra.mxu0 0.0
    %1847 = vmatprep.subr.mxu0 0.0
    %1848 = vmatpush1.msra.mxu0 %v1630
    %1849 = vmatprep.subr.mxu0 0.0
    %1850 = vmatpush2.msra.mxu0 0.0
    %1851 = vmatprep.subr.mxu0 0.0
    %1852 = vmatpush2.msra.mxu0 0.0
    %1853 = vmatprep.subr.mxu0 0.0
    %1854 = vmatpush2.msra.mxu0 0.0
    %1855 = vmatprep.subr.mxu0 0.0
    %1856 = vmatpush2.msra.mxu0 0.0
    %1857 = vmatprep.subr.mxu0 0.0
    %1858 = vmatpush2.msra.mxu0 0.0
    %1859 = vmatprep.subr.mxu0 0.0
    %1860 = vmatpush2.msra.mxu0 0.0
    %1861 = vmatprep.subr.mxu0 0.0
    %1862 = vmatpush2.msra.mxu0 0.0
    %1863 = vmatprep.subr.mxu0 0.0
    %1864 = vmatpush2.msra.mxu0 0.0
    %1865 = vmatprep.subr.mxu0 0.0
    %1866 = vmatpush2.msra.mxu0 0.0
    %1867 = vmatprep.subr.mxu0 0.0
    %1868 = vmatpush2.msra.mxu0 0.0
    %1869 = vmatprep.subr.mxu0 0.0
    %1870 = vmatpush2.msra.mxu0 0.0
    %1871 = vmatprep.subr.mxu0 0.0
    %1872 = vmatpush2.msra.mxu0 0.0
    %1873 = vmatprep.subr.mxu0 0.0
    %1874 = vmatpush2.msra.mxu0 0.0
    %1875 = vmatprep.subr.mxu0 0.0
    %1876 = vmatpush2.msra.mxu0 0.0
    %1877 = vmatprep.subr.mxu0 0.0
    %1878 = vmatpush2.msra.mxu0 0.0
    %1879 = vmatprep.subr.mxu0 0.0
    %1880 = vmatpush2.msra.mxu0 0.0
    %1881 = vmatprep.mubr.f32.mxu0 0.0
    %1882 = vmatmul.mubr.f32.gmra.mxu0 %v1815
    %v1883 = vpop.f32.mrf.mxu0
    %v1884 = vadd.f32 0.0, %v1883
    %v1885 = vpop.f32.mrf.mxu0
    %1886 = vdwg.mxu0
    %v1888 = vsel %vm302, %v1813, 0
    %1890 = vmatprep.subr.mxu0 0.0
    %1891 = vmatpush1.msra.mxu0 0.0
    %1892 = vmatprep.subr.mxu0 0.0
    %1893 = vmatpush1.msra.mxu0 0.0
    %1894 = vmatprep.subr.mxu0 0.0
    %1895 = vmatpush1.msra.mxu0 0.0
    %1896 = vmatprep.subr.mxu0 0.0
    %1897 = vmatpush1.msra.mxu0 0.0
    %1898 = vmatprep.subr.mxu0 0.0
    %1899 = vmatpush1.msra.mxu0 0.0
    %1900 = vmatprep.subr.mxu0 0.0
    %1901 = vmatpush1.msra.mxu0 0.0
    %1902 = vmatprep.subr.mxu0 0.0
    %1903 = vmatpush1.msra.mxu0 0.0
    %1904 = vmatprep.subr.mxu0 0.0
    %1905 = vmatpush1.msra.mxu0 0.0
    %1906 = vmatprep.subr.mxu0 0.0
    %1907 = vmatpush1.msra.mxu0 0.0
    %1908 = vmatprep.subr.mxu0 0.0
    %1909 = vmatpush1.msra.mxu0 0.0
    %1910 = vmatprep.subr.mxu0 0.0
    %1911 = vmatpush1.msra.mxu0 0.0
    %1912 = vmatprep.subr.mxu0 0.0
    %1913 = vmatpush1.msra.mxu0 0.0
    %1914 = vmatprep.subr.mxu0 0.0
    %1915 = vmatpush1.msra.mxu0 0.0
    %1916 = vmatprep.subr.mxu0 0.0
    %1917 = vmatpush1.msra.mxu0 0.0
    %1918 = vmatprep.subr.mxu0 0.0
    %1919 = vmatpush1.msra.mxu0 0.0
    %1920 = vmatprep.subr.mxu0 0.0
    %1921 = vmatpush1.msra.mxu0 %v1635
    %1922 = vmatprep.subr.mxu0 0.0
    %1923 = vmatpush2.msra.mxu0 0.0
    %1924 = vmatprep.subr.mxu0 0.0
    %1925 = vmatpush2.msra.mxu0 0.0
    %1926 = vmatprep.subr.mxu0 0.0
    %1927 = vmatpush2.msra.mxu0 0.0
    %1928 = vmatprep.subr.mxu0 0.0
    %1929 = vmatpush2.msra.mxu0 0.0
    %1930 = vmatprep.subr.mxu0 0.0
    %1931 = vmatpush2.msra.mxu0 0.0
    %1932 = vmatprep.subr.mxu0 0.0
    %1933 = vmatpush2.msra.mxu0 0.0
    %1934 = vmatprep.subr.mxu0 0.0
    %1935 = vmatpush2.msra.mxu0 0.0
    %1936 = vmatprep.subr.mxu0 0.0
    %1937 = vmatpush2.msra.mxu0 0.0
    %1938 = vmatprep.subr.mxu0 0.0
    %1939 = vmatpush2.msra.mxu0 0.0
    %1940 = vmatprep.subr.mxu0 0.0
    %1941 = vmatpush2.msra.mxu0 0.0
    %1942 = vmatprep.subr.mxu0 0.0
    %1943 = vmatpush2.msra.mxu0 0.0
    %1944 = vmatprep.subr.mxu0 0.0
    %1945 = vmatpush2.msra.mxu0 0.0
    %1946 = vmatprep.subr.mxu0 0.0
    %1947 = vmatpush2.msra.mxu0 0.0
    %1948 = vmatprep.subr.mxu0 0.0
    %1949 = vmatpush2.msra.mxu0 0.0
    %1950 = vmatprep.subr.mxu0 0.0
    %1951 = vmatpush2.msra.mxu0 0.0
    %1952 = vmatprep.subr.mxu0 0.0
    %1953 = vmatpush2.msra.mxu0 0.0
    %1954 = vmatprep.mubr.f32.mxu0 0.0
    %1955 = vmatmul.mubr.f32.gmra.mxu0 %v1888
    %v1956 = vpop.f32.mrf.mxu0
    %v1957 = vadd.f32 0.0, %v1956
    %v1958 = vpop.f32.mrf.mxu0
    %1959 = vdwg.mxu0
    %s1960 = scalar_lea.vmem %s7, 16
    %v1961 = vld [vmem:[%s1960] sm:$0xff]
    %v1963 = vsel %vm302, %v1884, 0
    %v1966 = vsel %vm302, %v1957, 0
    %1968 = vmatprep.subr.mxu0 0.0
    %1969 = vmatpush1.msra.mxu0 0.0
    %1970 = vmatprep.subr.mxu0 0.0
    %1971 = vmatpush1.msra.mxu0 0.0
    %1972 = vmatprep.subr.mxu0 0.0
    %1973 = vmatpush1.msra.mxu0 0.0
    %1974 = vmatprep.subr.mxu0 0.0
    %1975 = vmatpush1.msra.mxu0 0.0
    %1976 = vmatprep.subr.mxu0 0.0
    %1977 = vmatpush1.msra.mxu0 0.0
    %1978 = vmatprep.subr.mxu0 0.0
    %1979 = vmatpush1.msra.mxu0 0.0
    %1980 = vmatprep.subr.mxu0 0.0
    %1981 = vmatpush1.msra.mxu0 0.0
    %1982 = vmatprep.subr.mxu0 0.0
    %1983 = vmatpush1.msra.mxu0 0.0
    %1984 = vmatprep.subr.mxu0 0.0
    %1985 = vmatpush1.msra.mxu0 0.0
    %1986 = vmatprep.subr.mxu0 0.0
    %1987 = vmatpush1.msra.mxu0 0.0
    %1988 = vmatprep.subr.mxu0 0.0
    %1989 = vmatpush1.msra.mxu0 0.0
    %1990 = vmatprep.subr.mxu0 0.0
    %1991 = vmatpush1.msra.mxu0 0.0
    %1992 = vmatprep.subr.mxu0 0.0
    %1993 = vmatpush1.msra.mxu0 0.0
    %1994 = vmatprep.subr.mxu0 0.0
    %1995 = vmatpush1.msra.mxu0 0.0
    %1996 = vmatprep.subr.mxu0 0.0
    %1997 = vmatpush1.msra.mxu0 0.0
    %1998 = vmatprep.subr.mxu0 0.0
    %1999 = vmatpush1.msra.mxu0 %v1961
    %2000 = vmatprep.subr.mxu0 0.0
    %2001 = vmatpush2.msra.mxu0 0.0
    %2002 = vmatprep.subr.mxu0 0.0
    %2003 = vmatpush2.msra.mxu0 0.0
    %2004 = vmatprep.subr.mxu0 0.0
    %2005 = vmatpush2.msra.mxu0 0.0
    %2006 = vmatprep.subr.mxu0 0.0
    %2007 = vmatpush2.msra.mxu0 0.0
    %2008 = vmatprep.subr.mxu0 0.0
    %2009 = vmatpush2.msra.mxu0 0.0
    %2010 = vmatprep.subr.mxu0 0.0
    %2011 = vmatpush2.msra.mxu0 0.0
    %2012 = vmatprep.subr.mxu0 0.0
    %2013 = vmatpush2.msra.mxu0 0.0
    %2014 = vmatprep.subr.mxu0 0.0
    %2015 = vmatpush2.msra.mxu0 0.0
    %2016 = vmatprep.subr.mxu0 0.0
    %2017 = vmatpush2.msra.mxu0 0.0
    %2018 = vmatprep.subr.mxu0 0.0
    %2019 = vmatpush2.msra.mxu0 0.0
    %2020 = vmatprep.subr.mxu0 0.0
    %2021 = vmatpush2.msra.mxu0 0.0
    %2022 = vmatprep.subr.mxu0 0.0
    %2023 = vmatpush2.msra.mxu0 0.0
    %2024 = vmatprep.subr.mxu0 0.0
    %2025 = vmatpush2.msra.mxu0 0.0
    %2026 = vmatprep.subr.mxu0 0.0
    %2027 = vmatpush2.msra.mxu0 0.0
    %2028 = vmatprep.subr.mxu0 0.0
    %2029 = vmatpush2.msra.mxu0 0.0
    %2030 = vmatprep.subr.mxu0 0.0
    %2031 = vmatpush2.msra.mxu0 0.0
    %2032 = vmatprep.mubr.f32.mxu0 0.0
    %2033 = vmatmul.mubr.f32.gmra.mxu0 %v1963
    %v2034 = vpop.f32.mrf.mxu0
    %v2035 = vadd.f32 0.0, %v2034
    %v2036 = vpop.f32.mrf.mxu0
    %2037 = vmatprep.mubr.f32.mxu0 0.0
    %2038 = vmatmul.mubr.f32.gmra.mxu0 %v1966
    %v2039 = vpop.f32.mrf.mxu0
    %v2040 = vadd.f32 0.0, %v2039
    %v2041 = vpop.f32.mrf.mxu0
    %2042 = vdwg.mxu0
    %v2043 = vadd.f32 %v1366, %v2035
    %v2044 = vadd.f32 %v1371, %v2040
    %s2045 = scalar_lea.vmem %s1, 96
    %v2046 = vld [vmem:[%s2045] sm:$0xff]
    %v2047 = vld [vmem:[%s2045 + $0x8] sm:$0xff]
    %v2048 = vld [vmem:[%s2045 + $0x10] sm:$0xff]
    %v2049 = vld [vmem:[%s2045 + $0x18] sm:$0xff]
    %s2050 = scalar_lea.vmem %s4, 3
    %v2051 = vld [vmem:[%s2050] sm:$0x1]
    %v2053 = vlaneseq
    %v2054 = vshrl.u32 %v2053, 7
    %v2055 = vsub.s32 0, %v2054
    %v2056 = vrot.slane %v2051, %v2055
    %2058 = vmatprep.subr.mxu0 0.0
    %2059 = vmatpush1.msra.mxu0 0.0
    %2060 = vmatprep.subr.mxu0 0.0
    %2061 = vmatpush1.msra.mxu0 0.0
    %2062 = vmatprep.subr.mxu0 0.0
    %2063 = vmatpush1.msra.mxu0 0.0
    %2064 = vmatprep.subr.mxu0 0.0
    %2065 = vmatpush1.msra.mxu0 0.0
    %2066 = vmatprep.subr.mxu0 0.0
    %2067 = vmatpush1.msra.mxu0 0.0
    %2068 = vmatprep.subr.mxu0 0.0
    %2069 = vmatpush1.msra.mxu0 0.0
    %2070 = vmatprep.subr.mxu0 0.0
    %2071 = vmatpush1.msra.mxu0 0.0
    %2072 = vmatprep.subr.mxu0 0.0
    %2073 = vmatpush1.msra.mxu0 0.0
    %2074 = vmatprep.subr.mxu0 0.0
    %2075 = vmatpush1.msra.mxu0 0.0
    %2076 = vmatprep.subr.mxu0 0.0
    %2077 = vmatpush1.msra.mxu0 0.0
    %2078 = vmatprep.subr.mxu0 0.0
    %2079 = vmatpush1.msra.mxu0 0.0
    %2080 = vmatprep.subr.mxu0 0.0
    %2081 = vmatpush1.msra.mxu0 0.0
    %2082 = vmatprep.subr.mxu0 0.0
    %2083 = vmatpush1.msra.mxu0 %v2049
    %2084 = vmatprep.subr.mxu0 0.0
    %2085 = vmatpush1.msra.mxu0 %v2048
    %2086 = vmatprep.subr.mxu0 0.0
    %2087 = vmatpush1.msra.mxu0 %v2047
    %2088 = vmatprep.subr.mxu0 0.0
    %2089 = vmatpush1.msra.mxu0 %v2046
    %2090 = vmatprep.subr.mxu0 0.0
    %2091 = vmatpush2.msra.mxu0 0.0
    %2092 = vmatprep.subr.mxu0 0.0
    %2093 = vmatpush2.msra.mxu0 0.0
    %2094 = vmatprep.subr.mxu0 0.0
    %2095 = vmatpush2.msra.mxu0 0.0
    %2096 = vmatprep.subr.mxu0 0.0
    %2097 = vmatpush2.msra.mxu0 0.0
    %2098 = vmatprep.subr.mxu0 0.0
    %2099 = vmatpush2.msra.mxu0 0.0
    %2100 = vmatprep.subr.mxu0 0.0
    %2101 = vmatpush2.msra.mxu0 0.0
    %2102 = vmatprep.subr.mxu0 0.0
    %2103 = vmatpush2.msra.mxu0 0.0
    %2104 = vmatprep.subr.mxu0 0.0
    %2105 = vmatpush2.msra.mxu0 0.0
    %2106 = vmatprep.subr.mxu0 0.0
    %2107 = vmatpush2.msra.mxu0 0.0
    %2108 = vmatprep.subr.mxu0 0.0
    %2109 = vmatpush2.msra.mxu0 0.0
    %2110 = vmatprep.subr.mxu0 0.0
    %2111 = vmatpush2.msra.mxu0 0.0
    %2112 = vmatprep.subr.mxu0 0.0
    %2113 = vmatpush2.msra.mxu0 0.0
    %2114 = vmatprep.subr.mxu0 0.0
    %2115 = vmatpush2.msra.mxu0 0.0
    %2116 = vmatprep.subr.mxu0 0.0
    %2117 = vmatpush2.msra.mxu0 0.0
    %2118 = vmatprep.subr.mxu0 0.0
    %2119 = vmatpush2.msra.mxu0 0.0
    %2120 = vmatprep.subr.mxu0 0.0
    %2121 = vmatpush2.msra.mxu0 0.0
    %2122 = vmatprep.mubr.f32.mxu0 0.0
    %2123 = vmatmul.mubr.f32.gmra.mxu0 %v48
    %v2124 = vpop.f32.mrf.mxu0
    %v2125 = vadd.f32 %v2056, %v2124
    %v2126 = vpop.f32.mrf.mxu0
    %2127 = vmatprep.mubr.f32.mxu0 0.0
    %2128 = vmatmul.mubr.f32.gmra.mxu0 %v51
    %v2129 = vpop.f32.mrf.mxu0
    %v2130 = vadd.f32 %v2056, %v2129
    %v2131 = vpop.f32.mrf.mxu0
    %2132 = vdwg.mxu0
    %s2133 = scalar_lea.vmem %s2, 96
    %v2134 = vld [vmem:[%s2133] sm:$0xff]
    %v2135 = vld [vmem:[%s2133 + $0x8] sm:$0xff]
    %v2136 = vld [vmem:[%s2133 + $0x10] sm:$0xff]
    %v2137 = vld [vmem:[%s2133 + $0x18] sm:$0xff]
    %s2138 = scalar_lea.vmem %s5, 3
    %v2139 = vld [vmem:[%s2138] sm:$0x1]
    %v2141 = vlaneseq
    %v2142 = vshrl.u32 %v2141, 7
    %v2143 = vsub.s32 0, %v2142
    %v2144 = vrot.slane %v2139, %v2143
    %2146 = vmatprep.subr.mxu0 0.0
    %2147 = vmatpush1.msra.mxu0 0.0
    %2148 = vmatprep.subr.mxu0 0.0
    %2149 = vmatpush1.msra.mxu0 0.0
    %2150 = vmatprep.subr.mxu0 0.0
    %2151 = vmatpush1.msra.mxu0 0.0
    %2152 = vmatprep.subr.mxu0 0.0
    %2153 = vmatpush1.msra.mxu0 0.0
    %2154 = vmatprep.subr.mxu0 0.0
    %2155 = vmatpush1.msra.mxu0 0.0
    %2156 = vmatprep.subr.mxu0 0.0
    %2157 = vmatpush1.msra.mxu0 0.0
    %2158 = vmatprep.subr.mxu0 0.0
    %2159 = vmatpush1.msra.mxu0 0.0
    %2160 = vmatprep.subr.mxu0 0.0
    %2161 = vmatpush1.msra.mxu0 0.0
    %2162 = vmatprep.subr.mxu0 0.0
    %2163 = vmatpush1.msra.mxu0 0.0
    %2164 = vmatprep.subr.mxu0 0.0
    %2165 = vmatpush1.msra.mxu0 0.0
    %2166 = vmatprep.subr.mxu0 0.0
    %2167 = vmatpush1.msra.mxu0 0.0
    %2168 = vmatprep.subr.mxu0 0.0
    %2169 = vmatpush1.msra.mxu0 0.0
    %2170 = vmatprep.subr.mxu0 0.0
    %2171 = vmatpush1.msra.mxu0 %v2137
    %2172 = vmatprep.subr.mxu0 0.0
    %2173 = vmatpush1.msra.mxu0 %v2136
    %2174 = vmatprep.subr.mxu0 0.0
    %2175 = vmatpush1.msra.mxu0 %v2135
    %2176 = vmatprep.subr.mxu0 0.0
    %2177 = vmatpush1.msra.mxu0 %v2134
    %2178 = vmatprep.subr.mxu0 0.0
    %2179 = vmatpush2.msra.mxu0 0.0
    %2180 = vmatprep.subr.mxu0 0.0
    %2181 = vmatpush2.msra.mxu0 0.0
    %2182 = vmatprep.subr.mxu0 0.0
    %2183 = vmatpush2.msra.mxu0 0.0
    %2184 = vmatprep.subr.mxu0 0.0
    %2185 = vmatpush2.msra.mxu0 0.0
    %2186 = vmatprep.subr.mxu0 0.0
    %2187 = vmatpush2.msra.mxu0 0.0
    %2188 = vmatprep.subr.mxu0 0.0
    %2189 = vmatpush2.msra.mxu0 0.0
    %2190 = vmatprep.subr.mxu0 0.0
    %2191 = vmatpush2.msra.mxu0 0.0
    %2192 = vmatprep.subr.mxu0 0.0
    %2193 = vmatpush2.msra.mxu0 0.0
    %2194 = vmatprep.subr.mxu0 0.0
    %2195 = vmatpush2.msra.mxu0 0.0
    %2196 = vmatprep.subr.mxu0 0.0
    %2197 = vmatpush2.msra.mxu0 0.0
    %2198 = vmatprep.subr.mxu0 0.0
    %2199 = vmatpush2.msra.mxu0 0.0
    %2200 = vmatprep.subr.mxu0 0.0
    %2201 = vmatpush2.msra.mxu0 0.0
    %2202 = vmatprep.subr.mxu0 0.0
    %2203 = vmatpush2.msra.mxu0 0.0
    %2204 = vmatprep.subr.mxu0 0.0
    %2205 = vmatpush2.msra.mxu0 0.0
    %2206 = vmatprep.subr.mxu0 0.0
    %2207 = vmatpush2.msra.mxu0 0.0
    %2208 = vmatprep.subr.mxu0 0.0
    %2209 = vmatpush2.msra.mxu0 0.0
    %2210 = vmatprep.mubr.f32.mxu0 0.0
    %2211 = vmatmul.mubr.f32.gmra.mxu0 %v48
    %v2212 = vpop.f32.mrf.mxu0
    %v2213 = vadd.f32 %v2144, %v2212
    %v2214 = vpop.f32.mrf.mxu0
    %2215 = vmatprep.mubr.f32.mxu0 0.0
    %2216 = vmatmul.mubr.f32.gmra.mxu0 %v51
    %v2217 = vpop.f32.mrf.mxu0
    %v2218 = vadd.f32 %v2144, %v2217
    %v2219 = vpop.f32.mrf.mxu0
    %2220 = vdwg.mxu0
    %s2221 = scalar_lea.vmem %s3, 96
    %v2222 = vld [vmem:[%s2221] sm:$0xff]
    %v2223 = vld [vmem:[%s2221 + $0x8] sm:$0xff]
    %v2224 = vld [vmem:[%s2221 + $0x10] sm:$0xff]
    %v2225 = vld [vmem:[%s2221 + $0x18] sm:$0xff]
    %s2226 = scalar_lea.vmem %s6, 3
    %v2227 = vld [vmem:[%s2226] sm:$0x1]
    %v2229 = vlaneseq
    %v2230 = vshrl.u32 %v2229, 7
    %v2231 = vsub.s32 0, %v2230
    %v2232 = vrot.slane %v2227, %v2231
    %2234 = vmatprep.subr.mxu0 0.0
    %2235 = vmatpush1.msra.mxu0 0.0
    %2236 = vmatprep.subr.mxu0 0.0
    %2237 = vmatpush1.msra.mxu0 0.0
    %2238 = vmatprep.subr.mxu0 0.0
    %2239 = vmatpush1.msra.mxu0 0.0
    %2240 = vmatprep.subr.mxu0 0.0
    %2241 = vmatpush1.msra.mxu0 0.0
    %2242 = vmatprep.subr.mxu0 0.0
    %2243 = vmatpush1.msra.mxu0 0.0
    %2244 = vmatprep.subr.mxu0 0.0
    %2245 = vmatpush1.msra.mxu0 0.0
    %2246 = vmatprep.subr.mxu0 0.0
    %2247 = vmatpush1.msra.mxu0 0.0
    %2248 = vmatprep.subr.mxu0 0.0
    %2249 = vmatpush1.msra.mxu0 0.0
    %2250 = vmatprep.subr.mxu0 0.0
    %2251 = vmatpush1.msra.mxu0 0.0
    %2252 = vmatprep.subr.mxu0 0.0
    %2253 = vmatpush1.msra.mxu0 0.0
    %2254 = vmatprep.subr.mxu0 0.0
    %2255 = vmatpush1.msra.mxu0 0.0
    %2256 = vmatprep.subr.mxu0 0.0
    %2257 = vmatpush1.msra.mxu0 0.0
    %2258 = vmatprep.subr.mxu0 0.0
    %2259 = vmatpush1.msra.mxu0 %v2225
    %2260 = vmatprep.subr.mxu0 0.0
    %2261 = vmatpush1.msra.mxu0 %v2224
    %2262 = vmatprep.subr.mxu0 0.0
    %2263 = vmatpush1.msra.mxu0 %v2223
    %2264 = vmatprep.subr.mxu0 0.0
    %2265 = vmatpush1.msra.mxu0 %v2222
    %2266 = vmatprep.subr.mxu0 0.0
    %2267 = vmatpush2.msra.mxu0 0.0
    %2268 = vmatprep.subr.mxu0 0.0
    %2269 = vmatpush2.msra.mxu0 0.0
    %2270 = vmatprep.subr.mxu0 0.0
    %2271 = vmatpush2.msra.mxu0 0.0
    %2272 = vmatprep.subr.mxu0 0.0
    %2273 = vmatpush2.msra.mxu0 0.0
    %2274 = vmatprep.subr.mxu0 0.0
    %2275 = vmatpush2.msra.mxu0 0.0
    %2276 = vmatprep.subr.mxu0 0.0
    %2277 = vmatpush2.msra.mxu0 0.0
    %2278 = vmatprep.subr.mxu0 0.0
    %2279 = vmatpush2.msra.mxu0 0.0
    %2280 = vmatprep.subr.mxu0 0.0
    %2281 = vmatpush2.msra.mxu0 0.0
    %2282 = vmatprep.subr.mxu0 0.0
    %2283 = vmatpush2.msra.mxu0 0.0
    %2284 = vmatprep.subr.mxu0 0.0
    %2285 = vmatpush2.msra.mxu0 0.0
    %2286 = vmatprep.subr.mxu0 0.0
    %2287 = vmatpush2.msra.mxu0 0.0
    %2288 = vmatprep.subr.mxu0 0.0
    %2289 = vmatpush2.msra.mxu0 0.0
    %2290 = vmatprep.subr.mxu0 0.0
    %2291 = vmatpush2.msra.mxu0 0.0
    %2292 = vmatprep.subr.mxu0 0.0
    %2293 = vmatpush2.msra.mxu0 0.0
    %2294 = vmatprep.subr.mxu0 0.0
    %2295 = vmatpush2.msra.mxu0 0.0
    %2296 = vmatprep.subr.mxu0 0.0
    %2297 = vmatpush2.msra.mxu0 0.0
    %2298 = vmatprep.mubr.f32.mxu0 0.0
    %2299 = vmatmul.mubr.f32.gmra.mxu0 %v48
    %v2300 = vpop.f32.mrf.mxu0
    %v2301 = vadd.f32 %v2232, %v2300
    %v2302 = vpop.f32.mrf.mxu0
    %2303 = vmatprep.mubr.f32.mxu0 0.0
    %2304 = vmatmul.mubr.f32.gmra.mxu0 %v51
    %v2305 = vpop.f32.mrf.mxu0
    %v2306 = vadd.f32 %v2232, %v2305
    %v2307 = vpop.f32.mrf.mxu0
    %2308 = vdwg.mxu0
    %v2309 = vmul.f32 %v2125, 0.35355338
    %v2310 = vmul.f32 %v2130, 0.35355338
    %v2312 = vsel %vm302, %v2309, 0
    %v2315 = vsel %vm302, %v2213, 0
    %2317 = vmatprep.subr.mxu0 0.0
    %2318 = vmatpush1.xpose.msra.mxu0 0.0
    %2319 = vmatprep.subr.mxu0 0.0
    %2320 = vmatpush1.xpose.msra.mxu0 0.0
    %2321 = vmatprep.subr.mxu0 0.0
    %2322 = vmatpush1.xpose.msra.mxu0 0.0
    %2323 = vmatprep.subr.mxu0 0.0
    %2324 = vmatpush1.xpose.msra.mxu0 0.0
    %2325 = vmatprep.subr.mxu0 0.0
    %2326 = vmatpush1.xpose.msra.mxu0 0.0
    %2327 = vmatprep.subr.mxu0 0.0
    %2328 = vmatpush1.xpose.msra.mxu0 0.0
    %2329 = vmatprep.subr.mxu0 0.0
    %2330 = vmatpush1.xpose.msra.mxu0 0.0
    %2331 = vmatprep.subr.mxu0 0.0
    %2332 = vmatpush1.xpose.msra.mxu0 0.0
    %2333 = vmatprep.subr.mxu0 0.0
    %2334 = vmatpush1.xpose.msra.mxu0 0.0
    %2335 = vmatprep.subr.mxu0 0.0
    %2336 = vmatpush1.xpose.msra.mxu0 0.0
    %2337 = vmatprep.subr.mxu0 0.0
    %2338 = vmatpush1.xpose.msra.mxu0 0.0
    %2339 = vmatprep.subr.mxu0 0.0
    %2340 = vmatpush1.xpose.msra.mxu0 0.0
    %2341 = vmatprep.subr.mxu0 0.0
    %2342 = vmatpush1.xpose.msra.mxu0 0.0
    %2343 = vmatprep.subr.mxu0 0.0
    %2344 = vmatpush1.xpose.msra.mxu0 0.0
    %2345 = vmatprep.subr.mxu0 0.0
    %2346 = vmatpush1.xpose.msra.mxu0 0.0
    %2347 = vmatprep.subr.mxu0 0.0
    %2348 = vmatpush1.xpose.msra.mxu0 %v2315
    %2349 = vmatprep.subr.mxu0 0.0
    %2350 = vmatpush2.xpose.msra.mxu0 0.0
    %2351 = vmatprep.subr.mxu0 0.0
    %2352 = vmatpush2.xpose.msra.mxu0 0.0
    %2353 = vmatprep.subr.mxu0 0.0
    %2354 = vmatpush2.xpose.msra.mxu0 0.0
    %2355 = vmatprep.subr.mxu0 0.0
    %2356 = vmatpush2.xpose.msra.mxu0 0.0
    %2357 = vmatprep.subr.mxu0 0.0
    %2358 = vmatpush2.xpose.msra.mxu0 0.0
    %2359 = vmatprep.subr.mxu0 0.0
    %2360 = vmatpush2.xpose.msra.mxu0 0.0
    %2361 = vmatprep.subr.mxu0 0.0
    %2362 = vmatpush2.xpose.msra.mxu0 0.0
    %2363 = vmatprep.subr.mxu0 0.0
    %2364 = vmatpush2.xpose.msra.mxu0 0.0
    %2365 = vmatprep.subr.mxu0 0.0
    %2366 = vmatpush2.xpose.msra.mxu0 0.0
    %2367 = vmatprep.subr.mxu0 0.0
    %2368 = vmatpush2.xpose.msra.mxu0 0.0
    %2369 = vmatprep.subr.mxu0 0.0
    %2370 = vmatpush2.xpose.msra.mxu0 0.0
    %2371 = vmatprep.subr.mxu0 0.0
    %2372 = vmatpush2.xpose.msra.mxu0 0.0
    %2373 = vmatprep.subr.mxu0 0.0
    %2374 = vmatpush2.xpose.msra.mxu0 0.0
    %2375 = vmatprep.subr.mxu0 0.0
    %2376 = vmatpush2.xpose.msra.mxu0 0.0
    %2377 = vmatprep.subr.mxu0 0.0
    %2378 = vmatpush2.xpose.msra.mxu0 0.0
    %2379 = vmatprep.subr.mxu0 0.0
    %2380 = vmatpush2.xpose.msra.mxu0 0.0
    %2381 = vmatprep.mubr.f32.mxu0 0.0
    %2382 = vmatmul.mubr.f32.gmra.mxu0 %v2312
    %v2383 = vpop.f32.mrf.mxu0
    %v2384 = vadd.f32 0.0, %v2383
    %v2385 = vpop.f32.mrf.mxu0
    %2386 = vdwg.mxu0
    %v2388 = vsel %vm302, %v2310, 0
    %v2391 = vsel %vm302, %v2218, 0
    %2393 = vmatprep.subr.mxu0 0.0
    %2394 = vmatpush1.xpose.msra.mxu0 0.0
    %2395 = vmatprep.subr.mxu0 0.0
    %2396 = vmatpush1.xpose.msra.mxu0 0.0
    %2397 = vmatprep.subr.mxu0 0.0
    %2398 = vmatpush1.xpose.msra.mxu0 0.0
    %2399 = vmatprep.subr.mxu0 0.0
    %2400 = vmatpush1.xpose.msra.mxu0 0.0
    %2401 = vmatprep.subr.mxu0 0.0
    %2402 = vmatpush1.xpose.msra.mxu0 0.0
    %2403 = vmatprep.subr.mxu0 0.0
    %2404 = vmatpush1.xpose.msra.mxu0 0.0
    %2405 = vmatprep.subr.mxu0 0.0
    %2406 = vmatpush1.xpose.msra.mxu0 0.0
    %2407 = vmatprep.subr.mxu0 0.0
    %2408 = vmatpush1.xpose.msra.mxu0 0.0
    %2409 = vmatprep.subr.mxu0 0.0
    %2410 = vmatpush1.xpose.msra.mxu0 0.0
    %2411 = vmatprep.subr.mxu0 0.0
    %2412 = vmatpush1.xpose.msra.mxu0 0.0
    %2413 = vmatprep.subr.mxu0 0.0
    %2414 = vmatpush1.xpose.msra.mxu0 0.0
    %2415 = vmatprep.subr.mxu0 0.0
    %2416 = vmatpush1.xpose.msra.mxu0 0.0
    %2417 = vmatprep.subr.mxu0 0.0
    %2418 = vmatpush1.xpose.msra.mxu0 0.0
    %2419 = vmatprep.subr.mxu0 0.0
    %2420 = vmatpush1.xpose.msra.mxu0 0.0
    %2421 = vmatprep.subr.mxu0 0.0
    %2422 = vmatpush1.xpose.msra.mxu0 0.0
    %2423 = vmatprep.subr.mxu0 0.0
    %2424 = vmatpush1.xpose.msra.mxu0 %v2391
    %2425 = vmatprep.subr.mxu0 0.0
    %2426 = vmatpush2.xpose.msra.mxu0 0.0
    %2427 = vmatprep.subr.mxu0 0.0
    %2428 = vmatpush2.xpose.msra.mxu0 0.0
    %2429 = vmatprep.subr.mxu0 0.0
    %2430 = vmatpush2.xpose.msra.mxu0 0.0
    %2431 = vmatprep.subr.mxu0 0.0
    %2432 = vmatpush2.xpose.msra.mxu0 0.0
    %2433 = vmatprep.subr.mxu0 0.0
    %2434 = vmatpush2.xpose.msra.mxu0 0.0
    %2435 = vmatprep.subr.mxu0 0.0
    %2436 = vmatpush2.xpose.msra.mxu0 0.0
    %2437 = vmatprep.subr.mxu0 0.0
    %2438 = vmatpush2.xpose.msra.mxu0 0.0
    %2439 = vmatprep.subr.mxu0 0.0
    %2440 = vmatpush2.xpose.msra.mxu0 0.0
    %2441 = vmatprep.subr.mxu0 0.0
    %2442 = vmatpush2.xpose.msra.mxu0 0.0
    %2443 = vmatprep.subr.mxu0 0.0
    %2444 = vmatpush2.xpose.msra.mxu0 0.0
    %2445 = vmatprep.subr.mxu0 0.0
    %2446 = vmatpush2.xpose.msra.mxu0 0.0
    %2447 = vmatprep.subr.mxu0 0.0
    %2448 = vmatpush2.xpose.msra.mxu0 0.0
    %2449 = vmatprep.subr.mxu0 0.0
    %2450 = vmatpush2.xpose.msra.mxu0 0.0
    %2451 = vmatprep.subr.mxu0 0.0
    %2452 = vmatpush2.xpose.msra.mxu0 0.0
    %2453 = vmatprep.subr.mxu0 0.0
    %2454 = vmatpush2.xpose.msra.mxu0 0.0
    %2455 = vmatprep.subr.mxu0 0.0
    %2456 = vmatpush2.xpose.msra.mxu0 0.0
    %2457 = vmatprep.mubr.f32.mxu0 0.0
    %2458 = vmatmul.mubr.f32.gmra.mxu0 %v2388
    %v2459 = vpop.f32.mrf.mxu0
    %v2460 = vadd.f32 0.0, %v2459
    %v2461 = vpop.f32.mrf.mxu0
    %2462 = vdwg.mxu0
    %v2463 = vsel %vm302, %v2384, -inf
    %2464 = vmax.xlane.f32.xlu0 %v2463
    %v2465 = vpop.xlane.xlu0 %2464
    %v2466 = vsel %vm302, %v2460, -inf
    %2467 = vmax.xlane.f32.xlu0 %v2466
    %v2468 = vpop.xlane.xlu0 %2467
    %v2469 = vsub.f32 %v2384, %v2465
    %v2470 = vsub.f32 %v2460, %v2468
    %v2471 = vmul.f32 %v2469, 1.442695
    %v2472 = vpow.pop %v2471
    %v2473 = vmul.f32 %v2470, 1.442695
    %v2474 = vpow.pop %v2473
    %v2475 = vsel %vm302, %v2472, 0.0
    %2476 = vadd.xlane.f32.xlu0 %v2475
    %v2477 = vpop.xlane.xlu0 %2476
    %v2478 = vsel %vm302, %v2474, 0.0
    %2479 = vadd.xlane.f32.xlu0 %v2478
    %v2480 = vpop.xlane.xlu0 %2479
    %v2481 = vrcp.pop %v2477
    %v2482 = vrcp.pop %v2480
    %v2483 = vmul.f32 %v2472, %v2481
    %v2484 = vmul.f32 %v2474, %v2482
    %v2486 = vsel %vm302, %v2483, 0
    %2488 = vmatprep.subr.mxu0 0.0
    %2489 = vmatpush1.msra.mxu0 0.0
    %2490 = vmatprep.subr.mxu0 0.0
    %2491 = vmatpush1.msra.mxu0 0.0
    %2492 = vmatprep.subr.mxu0 0.0
    %2493 = vmatpush1.msra.mxu0 0.0
    %2494 = vmatprep.subr.mxu0 0.0
    %2495 = vmatpush1.msra.mxu0 0.0
    %2496 = vmatprep.subr.mxu0 0.0
    %2497 = vmatpush1.msra.mxu0 0.0
    %2498 = vmatprep.subr.mxu0 0.0
    %2499 = vmatpush1.msra.mxu0 0.0
    %2500 = vmatprep.subr.mxu0 0.0
    %2501 = vmatpush1.msra.mxu0 0.0
    %2502 = vmatprep.subr.mxu0 0.0
    %2503 = vmatpush1.msra.mxu0 0.0
    %2504 = vmatprep.subr.mxu0 0.0
    %2505 = vmatpush1.msra.mxu0 0.0
    %2506 = vmatprep.subr.mxu0 0.0
    %2507 = vmatpush1.msra.mxu0 0.0
    %2508 = vmatprep.subr.mxu0 0.0
    %2509 = vmatpush1.msra.mxu0 0.0
    %2510 = vmatprep.subr.mxu0 0.0
    %2511 = vmatpush1.msra.mxu0 0.0
    %2512 = vmatprep.subr.mxu0 0.0
    %2513 = vmatpush1.msra.mxu0 0.0
    %2514 = vmatprep.subr.mxu0 0.0
    %2515 = vmatpush1.msra.mxu0 0.0
    %2516 = vmatprep.subr.mxu0 0.0
    %2517 = vmatpush1.msra.mxu0 0.0
    %2518 = vmatprep.subr.mxu0 0.0
    %2519 = vmatpush1.msra.mxu0 %v2301
    %2520 = vmatprep.subr.mxu0 0.0
    %2521 = vmatpush2.msra.mxu0 0.0
    %2522 = vmatprep.subr.mxu0 0.0
    %2523 = vmatpush2.msra.mxu0 0.0
    %2524 = vmatprep.subr.mxu0 0.0
    %2525 = vmatpush2.msra.mxu0 0.0
    %2526 = vmatprep.subr.mxu0 0.0
    %2527 = vmatpush2.msra.mxu0 0.0
    %2528 = vmatprep.subr.mxu0 0.0
    %2529 = vmatpush2.msra.mxu0 0.0
    %2530 = vmatprep.subr.mxu0 0.0
    %2531 = vmatpush2.msra.mxu0 0.0
    %2532 = vmatprep.subr.mxu0 0.0
    %2533 = vmatpush2.msra.mxu0 0.0
    %2534 = vmatprep.subr.mxu0 0.0
    %2535 = vmatpush2.msra.mxu0 0.0
    %2536 = vmatprep.subr.mxu0 0.0
    %2537 = vmatpush2.msra.mxu0 0.0
    %2538 = vmatprep.subr.mxu0 0.0
    %2539 = vmatpush2.msra.mxu0 0.0
    %2540 = vmatprep.subr.mxu0 0.0
    %2541 = vmatpush2.msra.mxu0 0.0
    %2542 = vmatprep.subr.mxu0 0.0
    %2543 = vmatpush2.msra.mxu0 0.0
    %2544 = vmatprep.subr.mxu0 0.0
    %2545 = vmatpush2.msra.mxu0 0.0
    %2546 = vmatprep.subr.mxu0 0.0
    %2547 = vmatpush2.msra.mxu0 0.0
    %2548 = vmatprep.subr.mxu0 0.0
    %2549 = vmatpush2.msra.mxu0 0.0
    %2550 = vmatprep.subr.mxu0 0.0
    %2551 = vmatpush2.msra.mxu0 0.0
    %2552 = vmatprep.mubr.f32.mxu0 0.0
    %2553 = vmatmul.mubr.f32.gmra.mxu0 %v2486
    %v2554 = vpop.f32.mrf.mxu0
    %v2555 = vadd.f32 0.0, %v2554
    %v2556 = vpop.f32.mrf.mxu0
    %2557 = vdwg.mxu0
    %v2559 = vsel %vm302, %v2484, 0
    %2561 = vmatprep.subr.mxu0 0.0
    %2562 = vmatpush1.msra.mxu0 0.0
    %2563 = vmatprep.subr.mxu0 0.0
    %2564 = vmatpush1.msra.mxu0 0.0
    %2565 = vmatprep.subr.mxu0 0.0
    %2566 = vmatpush1.msra.mxu0 0.0
    %2567 = vmatprep.subr.mxu0 0.0
    %2568 = vmatpush1.msra.mxu0 0.0
    %2569 = vmatprep.subr.mxu0 0.0
    %2570 = vmatpush1.msra.mxu0 0.0
    %2571 = vmatprep.subr.mxu0 0.0
    %2572 = vmatpush1.msra.mxu0 0.0
    %2573 = vmatprep.subr.mxu0 0.0
    %2574 = vmatpush1.msra.mxu0 0.0
    %2575 = vmatprep.subr.mxu0 0.0
    %2576 = vmatpush1.msra.mxu0 0.0
    %2577 = vmatprep.subr.mxu0 0.0
    %2578 = vmatpush1.msra.mxu0 0.0
    %2579 = vmatprep.subr.mxu0 0.0
    %2580 = vmatpush1.msra.mxu0 0.0
    %2581 = vmatprep.subr.mxu0 0.0
    %2582 = vmatpush1.msra.mxu0 0.0
    %2583 = vmatprep.subr.mxu0 0.0
    %2584 = vmatpush1.msra.mxu0 0.0
    %2585 = vmatprep.subr.mxu0 0.0
    %2586 = vmatpush1.msra.mxu0 0.0
    %2587 = vmatprep.subr.mxu0 0.0
    %2588 = vmatpush1.msra.mxu0 0.0
    %2589 = vmatprep.subr.mxu0 0.0
    %2590 = vmatpush1.msra.mxu0 0.0
    %2591 = vmatprep.subr.mxu0 0.0
    %2592 = vmatpush1.msra.mxu0 %v2306
    %2593 = vmatprep.subr.mxu0 0.0
    %2594 = vmatpush2.msra.mxu0 0.0
    %2595 = vmatprep.subr.mxu0 0.0
    %2596 = vmatpush2.msra.mxu0 0.0
    %2597 = vmatprep.subr.mxu0 0.0
    %2598 = vmatpush2.msra.mxu0 0.0
    %2599 = vmatprep.subr.mxu0 0.0
    %2600 = vmatpush2.msra.mxu0 0.0
    %2601 = vmatprep.subr.mxu0 0.0
    %2602 = vmatpush2.msra.mxu0 0.0
    %2603 = vmatprep.subr.mxu0 0.0
    %2604 = vmatpush2.msra.mxu0 0.0
    %2605 = vmatprep.subr.mxu0 0.0
    %2606 = vmatpush2.msra.mxu0 0.0
    %2607 = vmatprep.subr.mxu0 0.0
    %2608 = vmatpush2.msra.mxu0 0.0
    %2609 = vmatprep.subr.mxu0 0.0
    %2610 = vmatpush2.msra.mxu0 0.0
    %2611 = vmatprep.subr.mxu0 0.0
    %2612 = vmatpush2.msra.mxu0 0.0
    %2613 = vmatprep.subr.mxu0 0.0
    %2614 = vmatpush2.msra.mxu0 0.0
    %2615 = vmatprep.subr.mxu0 0.0
    %2616 = vmatpush2.msra.mxu0 0.0
    %2617 = vmatprep.subr.mxu0 0.0
    %2618 = vmatpush2.msra.mxu0 0.0
    %2619 = vmatprep.subr.mxu0 0.0
    %2620 = vmatpush2.msra.mxu0 0.0
    %2621 = vmatprep.subr.mxu0 0.0
    %2622 = vmatpush2.msra.mxu0 0.0
    %2623 = vmatprep.subr.mxu0 0.0
    %2624 = vmatpush2.msra.mxu0 0.0
    %2625 = vmatprep.mubr.f32.mxu0 0.0
    %2626 = vmatmul.mubr.f32.gmra.mxu0 %v2559
    %v2627 = vpop.f32.mrf.mxu0
    %v2628 = vadd.f32 0.0, %v2627
    %v2629 = vpop.f32.mrf.mxu0
    %2630 = vdwg.mxu0
    %s2631 = scalar_lea.vmem %s7, 24
    %v2632 = vld [vmem:[%s2631] sm:$0xff]
    %v2634 = vsel %vm302, %v2555, 0
    %v2637 = vsel %vm302, %v2628, 0
    %2639 = vmatprep.subr.mxu0 0.0
    %2640 = vmatpush1.msra.mxu0 0.0
    %2641 = vmatprep.subr.mxu0 0.0
    %2642 = vmatpush1.msra.mxu0 0.0
    %2643 = vmatprep.subr.mxu0 0.0
    %2644 = vmatpush1.msra.mxu0 0.0
    %2645 = vmatprep.subr.mxu0 0.0
    %2646 = vmatpush1.msra.mxu0 0.0
    %2647 = vmatprep.subr.mxu0 0.0
    %2648 = vmatpush1.msra.mxu0 0.0
    %2649 = vmatprep.subr.mxu0 0.0
    %2650 = vmatpush1.msra.mxu0 0.0
    %2651 = vmatprep.subr.mxu0 0.0
    %2652 = vmatpush1.msra.mxu0 0.0
    %2653 = vmatprep.subr.mxu0 0.0
    %2654 = vmatpush1.msra.mxu0 0.0
    %2655 = vmatprep.subr.mxu0 0.0
    %2656 = vmatpush1.msra.mxu0 0.0
    %2657 = vmatprep.subr.mxu0 0.0
    %2658 = vmatpush1.msra.mxu0 0.0
    %2659 = vmatprep.subr.mxu0 0.0
    %2660 = vmatpush1.msra.mxu0 0.0
    %2661 = vmatprep.subr.mxu0 0.0
    %2662 = vmatpush1.msra.mxu0 0.0
    %2663 = vmatprep.subr.mxu0 0.0
    %2664 = vmatpush1.msra.mxu0 0.0
    %2665 = vmatprep.subr.mxu0 0.0
    %2666 = vmatpush1.msra.mxu0 0.0
    %2667 = vmatprep.subr.mxu0 0.0
    %2668 = vmatpush1.msra.mxu0 0.0
    %2669 = vmatprep.subr.mxu0 0.0
    %2670 = vmatpush1.msra.mxu0 %v2632
    %2671 = vmatprep.subr.mxu0 0.0
    %2672 = vmatpush2.msra.mxu0 0.0
    %2673 = vmatprep.subr.mxu0 0.0
    %2674 = vmatpush2.msra.mxu0 0.0
    %2675 = vmatprep.subr.mxu0 0.0
    %2676 = vmatpush2.msra.mxu0 0.0
    %2677 = vmatprep.subr.mxu0 0.0
    %2678 = vmatpush2.msra.mxu0 0.0
    %2679 = vmatprep.subr.mxu0 0.0
    %2680 = vmatpush2.msra.mxu0 0.0
    %2681 = vmatprep.subr.mxu0 0.0
    %2682 = vmatpush2.msra.mxu0 0.0
    %2683 = vmatprep.subr.mxu0 0.0
    %2684 = vmatpush2.msra.mxu0 0.0
    %2685 = vmatprep.subr.mxu0 0.0
    %2686 = vmatpush2.msra.mxu0 0.0
    %2687 = vmatprep.subr.mxu0 0.0
    %2688 = vmatpush2.msra.mxu0 0.0
    %2689 = vmatprep.subr.mxu0 0.0
    %2690 = vmatpush2.msra.mxu0 0.0
    %2691 = vmatprep.subr.mxu0 0.0
    %2692 = vmatpush2.msra.mxu0 0.0
    %2693 = vmatprep.subr.mxu0 0.0
    %2694 = vmatpush2.msra.mxu0 0.0
    %2695 = vmatprep.subr.mxu0 0.0
    %2696 = vmatpush2.msra.mxu0 0.0
    %2697 = vmatprep.subr.mxu0 0.0
    %2698 = vmatpush2.msra.mxu0 0.0
    %2699 = vmatprep.subr.mxu0 0.0
    %2700 = vmatpush2.msra.mxu0 0.0
    %2701 = vmatprep.subr.mxu0 0.0
    %2702 = vmatpush2.msra.mxu0 0.0
    %2703 = vmatprep.mubr.f32.mxu0 0.0
    %2704 = vmatmul.mubr.f32.gmra.mxu0 %v2634
    %v2705 = vpop.f32.mrf.mxu0
    %v2706 = vadd.f32 0.0, %v2705
    %v2707 = vpop.f32.mrf.mxu0
    %2708 = vmatprep.mubr.f32.mxu0 0.0
    %2709 = vmatmul.mubr.f32.gmra.mxu0 %v2637
    %v2710 = vpop.f32.mrf.mxu0
    %v2711 = vadd.f32 0.0, %v2710
    %v2712 = vpop.f32.mrf.mxu0
    %2713 = vdwg.mxu0
    %v2714 = vadd.f32 %v2043, %v2706
    %v2715 = vadd.f32 %v2044, %v2711
    %v2716 = vld [vmem:[%s8] sm:$0x1]
    %v2718 = vlaneseq
    %v2719 = vshrl.u32 %v2718, 7
    %v2720 = vsub.s32 0, %v2719
    %v2721 = vrot.slane %v2716, %v2720
    %v2723 = vadd.f32 %v2714, %v2721
    %v2724 = vadd.f32 %v2715, %v2721
    %2725 = vst [vmem:[#allocation2] sm:$0xff] %v2723
    %2726 = vst [vmem:[#allocation2 + $0x8] sm:$0xff] %v2724
    // Predicated region
    $region38: #{tpu_custom_call.1} parent=1 // pred_check
      _
    $region39: #{tpu_custom_call.1} parent=1 // pred_check_branch
      %2728 = sbr.rel (0) target = $region41
    $region40: #{tpu_custom_call.1} parent=1 // pred_region
      %s2730 = ssub.s32 256, 256
      %2731 = vsyncadd [#allocation3], %s2730
      %s2732 = sshll.u32 [#allocation2], 4
      %s2733 = int_to_ptr.vmem [resolvable:$true] %s2732
      %2738 = dma.vmem_to_hbm [thread:$0]  %s2733, 256, %s9, [#allocation3], 128, 128, 8
    $region41: #{tpu_custom_call.1} parent=1 // pred_fallthru
      _
    // Predicated region
    $region42: #{tpu_custom_call.1} parent=1 // pred_check
      _
    $region43: #{tpu_custom_call.1} parent=1 // pred_check_branch
      %2740 = sbr.rel (0) target = $region45
    $region44: #{tpu_custom_call.1} parent=1 // pred_region
      %2741 = dma.done [#allocation3], 256
    $region45: #{tpu_custom_call.1} parent=1 // pred_fallthru
      _
    %2742 = vsyncpa [#allocation3], 1

</llo_original>
